<compile_context>
chip_gen: v5e
topology: v5e:2x2
jax: 0.10.0
libtpu: 0.0.40
codegen_flags: <defaults>
</compile_context>

<pallas_src>
import functools

import jax
import jax.numpy as jnp
from jax import lax
from jax.experimental import pallas as pl
from jax.experimental.pallas import tpu as pltpu


# 48 MiB fits v7x (64 MiB physical per TC) with headroom for double-buffered input tiles;
# may be raised toward ~96 MiB on v6e/v5e (128 MiB physical).
_VMEM_LIMIT_BYTES = 48 * 1024 * 1024

# bf16 MXU operands (peak MXU throughput; accumulation stays f32).  Set to None for a
# fully-f32 operand path (tighter numerics, slower MXU).
_MXU_OPERAND_DTYPE = jnp.bfloat16


def _maybe_cast(x, dtype):
    return x if dtype is None or x.dtype == dtype else x.astype(dtype)


def _round_up(x, m):
    return ((x + m - 1) // m) * m


def _choose_tile(size, preferred, granularity):
    """Return (tile, padded_size) with tile <= preferred.

    Never silently falls back to a huge full-extent tile for large non-divisible dims
    (that can blow the VMEM budget on v7x); instead the caller pads up to a tile multiple.
    """
    if size <= preferred:
        return size, size                 # small dim: single full-extent tile is fine
    t = preferred
    while t >= granularity:
        if size % t == 0:
            return t, size
        t //= 2
    return preferred, _round_up(size, preferred)


# ----------------------------- Pallas kernels ------------------------------

def _matmul_kernel(x_ref, w_ref, o_ref, acc_ref, *, operand_dtype):
    @pl.when(pl.program_id(2) == 0)
    def _():
        acc_ref[...] = jnp.zeros(acc_ref.shape, dtype=acc_ref.dtype)

    acc_ref[...] += jnp.dot(
        _maybe_cast(x_ref[...], operand_dtype),
        _maybe_cast(w_ref[...], operand_dtype),
        preferred_element_type=jnp.float32,
    )

    @pl.when(pl.program_id(2) == pl.num_programs(2) - 1)
    def _():
        o_ref[...] = acc_ref[...].astype(o_ref.dtype)


def _matmul_bias_kernel(x_ref, w_ref, b_ref, o_ref, acc_ref, *, operand_dtype):
    @pl.when(pl.program_id(2) == 0)
    def _():
        acc_ref[...] = jnp.zeros(acc_ref.shape, dtype=acc_ref.dtype)

    acc_ref[...] += jnp.dot(
        _maybe_cast(x_ref[...], operand_dtype),
        _maybe_cast(w_ref[...], operand_dtype),
        preferred_element_type=jnp.float32,
    )

    @pl.when(pl.program_id(2) == pl.num_programs(2) - 1)
    def _():
        o_ref[...] = (acc_ref[...] + b_ref[...].astype(jnp.float32)).astype(o_ref.dtype)


def _flash_attn_kernel(q_ref, k_ref, v_ref, o_ref, m_sc, l_sc, acc_sc, *,
                       heads, dim_head, n_actual, masked, operand_dtype):
    # q_ref: (tq, inner), k_ref/v_ref: (tkv, inner), o_ref: (tq, inner) -- lane-dense tiles.
    ki = pl.program_id(2)
    tkv = k_ref.shape[0]

    @pl.when(ki == 0)
    def _():
        m_sc[...] = jnp.full(m_sc.shape, -jnp.inf, dtype=m_sc.dtype)
        l_sc[...] = jnp.zeros(l_sc.shape, dtype=l_sc.dtype)
        acc_sc[...] = jnp.zeros(acc_sc.shape, dtype=acc_sc.dtype)

    if masked:   # static: only emitted when the sequence was padded
        col = lax.broadcasted_iota(jnp.int32, (1, tkv), 1) + ki * tkv
        kv_valid = col < n_actual                                    # (1, tkv)

    # All heads of this batch/q-tile handled per step; per-head slices are static lane
    # slices (no gathers).  The attention scale was folded into Wq on the host.
    # TODO(synk): for heads >= 8 with 256-wide tiles switch to lax.fori_loop over heads to
    #             bound vreg live ranges (verify no spills in the bundle dump first).
    for h in range(heads):
        hd = pl.ds(h * dim_head, dim_head)
        qh = _maybe_cast(q_ref[:, hd], operand_dtype)                # (tq,  d)
        kh = _maybe_cast(k_ref[:, hd], operand_dtype)                # (tkv, d)
        vh = _maybe_cast(v_ref[:, hd], operand_dtype)                # (tkv, d)

        # q @ k^T expressed directly as a contraction -> no materialized K transpose.
        s = lax.dot_general(qh, kh, (((1,), (1,)), ((), ())),
                            preferred_element_type=jnp.float32)      # (tq, tkv)
        if masked:
            s = jnp.where(kv_valid, s, jnp.float32(-1e30))

        m_prev = m_sc[h]                                             # (tq, 1)
        m_new = jnp.maximum(m_prev, jnp.max(s, axis=-1, keepdims=True))
        alpha = jnp.exp(m_prev - m_new)
        p = jnp.exp(s - m_new)                                       # (tq, tkv)
        l_sc[h] = alpha * l_sc[h] + jnp.sum(p, axis=-1, keepdims=True)
        acc_sc[h] = alpha * acc_sc[h] + jnp.dot(
            _maybe_cast(p, operand_dtype), vh, preferred_element_type=jnp.float32)
        m_sc[h] = m_new

    @pl.when(ki == pl.num_programs(2) - 1)
    def _():
        # Assemble all heads into a single lane-dense (tq, heads*dim_head) value so the
        # output write is one full-width store instead of `heads` masked partial stores.
        outs = []
        for h in range(heads):
            inv = pl.reciprocal(l_sc[h], approx=False)   # exact; runs once per q tile
            outs.append(acc_sc[h] * inv)
        o_ref[...] = jnp.concatenate(outs, axis=-1).astype(o_ref.dtype)


# ------------------------------ host wrappers -------------------------------

def pallas_matmul(x, w, b=None, *, tm=256, tn=256, tk=512, out_dtype=None,
                  operand_dtype=_MXU_OPERAND_DTYPE):
    """Tiled (M,K)@(K,N) with optional fused bias; f32 VMEM accumulator across K tiles.

    Non-divisible dims are zero-padded up to a tile multiple (never a full-extent tile)
    and the output is sliced back, so the VMEM footprint stays bounded on v7x.
    """
    M, K = x.shape
    K2, N = w.shape
    assert K == K2
    out_dtype = out_dtype or x.dtype

    tm, Mp = _choose_tile(M, tm, 8)
    tn, Np = _choose_tile(N, tn, 128)
    tk, Kp = _choose_tile(K, tk, 128)
    if Mp != M or Kp != K:
        x = jnp.pad(x, ((0, Mp - M), (0, Kp - K)))
    if Kp != K or Np != N:
        w = jnp.pad(w, ((0, Kp - K), (0, Np - N)))

    grid = (Mp // tm, Np // tn, Kp // tk)
    x_spec = pl.BlockSpec((tm, tk), lambda i, j, k: (i, k))
    w_spec = pl.BlockSpec((tk, tn), lambda i, j, k: (k, j))
    o_spec = pl.BlockSpec((tm, tn), lambda i, j, k: (i, j))
    scratch = [pltpu.VMEM((tm, tn), jnp.float32)]
    cparams = pltpu.CompilerParams(
        dimension_semantics=("parallel", "parallel", "arbitrary"),
        vmem_limit_bytes=_VMEM_LIMIT_BYTES,
    )

    if b is None:
        kern = functools.partial(_matmul_kernel, operand_dtype=operand_dtype)
        in_specs = [x_spec, w_spec]
        operands = (x, w)
    else:
        kern = functools.partial(_matmul_bias_kernel, operand_dtype=operand_dtype)
        b2 = b.reshape(1, N)
        if Np != N:
            b2 = jnp.pad(b2, ((0, 0), (0, Np - N)))
        in_specs = [x_spec, w_spec, pl.BlockSpec((1, tn), lambda i, j, k: (0, j))]
        operands = (x, w, b2)

    out = pl.pallas_call(
        kern,
        out_shape=jax.ShapeDtypeStruct((Mp, Np), out_dtype),
        grid_spec=pltpu.PrefetchScalarGridSpec(
            num_scalar_prefetch=0,
            grid=grid,
            in_specs=in_specs,
            out_specs=o_spec,
            scratch_shapes=scratch,
        ),
        compiler_params=cparams,
    )(*operands)

    if Mp != M or Np != N:
        out = out[:M, :N]
    return out


def pallas_flash_attention(qkv, *, heads, dim_head, n_actual, block_q=128, block_kv=128,
                           out_dtype=None, operand_dtype=_MXU_OPERAND_DTYPE):
    """Flash attention over the fused lane-dense (b, n_pad, 3*inner) qkv array.

    When inner = heads*dim_head is lane-aligned (multiple of 128), q/k/v are read directly
    from the fused array via lane-offset BlockSpecs (no separate q/k/v arrays in HBM).
    block_q/block_kv=128 is safe everywhere; raise to 256 on v6e/v7x (256-wide MXU) once
    vreg pressure of the head loop has been checked.
    """
    b, n_pad, three_inner = qkv.shape
    inner = heads * dim_head
    assert three_inner == 3 * inner
    out_dtype = out_dtype or qkv.dtype

    tq, _ = _choose_tile(n_pad, block_q, 8)
    tkv, _ = _choose_tile(n_pad, block_kv, 8)
    assert n_pad % tq == 0 and n_pad % tkv == 0, "caller must pad n to the attention tile"
    grid = (b, n_pad // tq, n_pad // tkv)   # KV axis innermost (reduction, "arbitrary")

    if inner % 128 == 0:
        # Lane-block offsets 0 / 1 / 2 into the single fused qkv array (no extra copies).
        operands = (qkv, qkv, qkv)
        q_spec = pl.BlockSpec((None, tq, inner), lambda bi, qi, ki: (bi, qi, 0))
        k_spec = pl.BlockSpec((None, tkv, inner), lambda bi, qi, ki: (bi, ki, 1))
        v_spec = pl.BlockSpec((None, tkv, inner), lambda bi, qi, ki: (bi, ki, 2))
    else:
        # TODO(synk): non-lane-aligned inner falls back to materialized host slices of the
        #             fused array (one extra HBM round trip for q/k/v).
        q = qkv[..., :inner]
        k = qkv[..., inner:2 * inner]
        v = qkv[..., 2 * inner:]
        operands = (q, k, v)
        q_spec = pl.BlockSpec((None, tq, inner), lambda bi, qi, ki: (bi, qi, 0))
        k_spec = pl.BlockSpec((None, tkv, inner), lambda bi, qi, ki: (bi, ki, 0))
        v_spec = pl.BlockSpec((None, tkv, inner), lambda bi, qi, ki: (bi, ki, 0))

    o_spec = pl.BlockSpec((None, tq, inner), lambda bi, qi, ki: (bi, qi, 0))

    kern = functools.partial(
        _flash_attn_kernel, heads=heads, dim_head=dim_head, n_actual=n_actual,
        masked=(n_pad != n_actual), operand_dtype=operand_dtype)

    return pl.pallas_call(
        kern,
        out_shape=jax.ShapeDtypeStruct((b, n_pad, inner), out_dtype),
        grid_spec=pltpu.PrefetchScalarGridSpec(
            num_scalar_prefetch=0,
            grid=grid,
            in_specs=[q_spec, k_spec, v_spec],
            out_specs=o_spec,
            scratch_shapes=[
                pltpu.VMEM((heads, tq, 1), jnp.float32),         # running max  m_i
                pltpu.VMEM((heads, tq, 1), jnp.float32),         # running sum  l_i
                pltpu.VMEM((heads, tq, dim_head), jnp.float32),  # output accumulator
            ],
        ),
        compiler_params=pltpu.CompilerParams(
            # b * (n/tq) independent parallel units -> feeds both v7x TensorCores when >= 2.
            dimension_semantics=("parallel", "parallel", "arbitrary"),
            vmem_limit_bytes=_VMEM_LIMIT_BYTES,
        ),
    )(*operands)


def attention_forward(x, params, *, heads, dim_head, block_n=128):
    """Full forward of the Attention module (mask=None).  Dropout(p=0.0) is identity."""
    # TODO(synk): optional `mask` path (pad + outer-product masking) not implemented.
    b, n, dim = x.shape
    inner = heads * dim_head
    scale = dim ** (-0.5)         # module uses dim**-0.5 (NOT dim_head**-0.5)

    w_qkv = params["w_qkv"]       # (dim, 3*inner), columns chunked as [Wq | Wk | Wv]
    w_out = params["w_out"]       # (inner, dim)
    b_out = params["b_out"]       # (dim,)

    # Fold the attention scale into the Q columns of the fused weight (one-time, static
    # weights) -> removes a (tq x tkv) VPU multiply per head per kv step in the kernel.
    col_scale = jnp.concatenate(
        [jnp.full((inner,), scale, w_qkv.dtype), jnp.ones((2 * inner,), w_qkv.dtype)])
    w_qkv_scaled = w_qkv * col_scale[None, :]

    # Pad the sequence to a multiple of the attention tile (padded KV rows are masked in
    # the kernel; padded Q rows are sliced off at the end) so tiling never degenerates to
    # a full-extent block for non-divisible n (e.g. ViT n=197).
    n_pad = _round_up(n, block_n) if n > block_n else n
    if n_pad != n:
        x = jnp.pad(x, ((0, 0), (0, n_pad - n), (0, 0)))

    act_dtype = _MXU_OPERAND_DTYPE if _MXU_OPERAND_DTYPE is not None else x.dtype

    # One fused QKV projection: x read from HBM once for Q, K and V; result stays in a
    # single lane-dense (b, n, 3*inner) bf16 array consumed in place by the flash kernel.
    x2d = x.reshape(b * n_pad, dim)
    qkv = pallas_matmul(x2d, w_qkv_scaled, out_dtype=act_dtype).reshape(b, n_pad, 3 * inner)

    o = pallas_flash_attention(qkv, heads=heads, dim_head=dim_head, n_actual=n,
                               block_q=block_n, block_kv=block_n, out_dtype=act_dtype)

    # Output projection + fused bias.
    out = pallas_matmul(o.reshape(b * n_pad, inner), w_out, b_out, out_dtype=x.dtype)
    out = out.reshape(b, n_pad, dim)
    if n_pad != n:
        out = out[:, :n, :]
    return out


# --------------------------------- main -------------------------------------

if __name__ == "__main__":
    # Small shapes consistent with the module's forward (inner = 128 -> lane-aligned path).
    batch, seq, dim = 2, 8, 32
    heads, dim_head = 4, 32
    inner = heads * dim_head

    key = jax.random.PRNGKey(0)
    k_x, k_qkv, k_out, k_b = jax.random.split(key, 4)

    x = jax.random.normal(k_x, (batch, seq, dim), dtype=jnp.float32)

    # Parameter shapes from __init__:
    #   to_qkv: Linear(dim, inner*3, bias=False)  -> w_qkv (dim, 3*inner)
    #   to_out: Linear(inner, dim)                -> w_out (inner, dim), b_out (dim,)
    params = {
        "w_qkv": jax.random.normal(k_qkv, (dim, 3 * inner), dtype=jnp.float32) * 0.05,
        "w_out": jax.random.normal(k_out, (inner, dim), dtype=jnp.float32) * 0.05,
        "b_out": jax.random.normal(k_b, (dim,), dtype=jnp.float32) * 0.05,
    }

    fwd = jax.jit(functools.partial(attention_forward, heads=heads, dim_head=dim_head))
    out = jax.block_until_ready(fwd(x, params))
    assert out.shape == (batch, seq, dim)

    # Cross-check against a pure-JAX f32 reference of the same math.
    def ref_forward(x, p):
        scale = dim ** (-0.5)
        qkv = x @ p["w_qkv"]
        qkv = qkv.reshape(batch, seq, 3, heads, dim_head)
        q = qkv[:, :, 0].transpose(0, 2, 1, 3)
        k = qkv[:, :, 1].transpose(0, 2, 1, 3)
        v = qkv[:, :, 2].transpose(0, 2, 1, 3)
        dots = jnp.einsum("bhid,bhjd->bhij", q, k) * scale
        attn = jax.nn.softmax(dots, axis=-1)
        o = jnp.einsum("bhij,bhjd->bhid", attn, v)
        o = o.transpose(0, 2, 1, 3).reshape(batch, seq, inner)
        return o @ p["w_out"] + p["b_out"]

    ref = ref_forward(x, params)
    # Tolerance loosened for bf16 MXU operands + bf16 qkv/o intermediates (f32 accumulation
    # everywhere).  Set _MXU_OPERAND_DTYPE = None for a tight full-f32 check.
    assert jnp.allclose(out, ref, atol=2e-2, rtol=2e-2), "mismatch vs reference"

    print("KERNEL_OK")
</pallas_src>

<mosaic_0001>
module attributes {stable_mosaic.version = 11 : i64} {
  func.func @_matmul_kernel(%arg0: i32, %arg1: i32, %arg2: i32, %arg3: memref<16x32xf32, #tpu.memory_space<vmem>>, %arg4: memref<32x128xf32, #tpu.memory_space<vmem>>, %arg5: memref<16x128xbf16, #tpu.memory_space<vmem>>, %arg6: memref<16x128xf32, #tpu.memory_space<vmem>>) attributes {dimension_semantics = [#tpu.dimension_semantics<parallel>, #tpu.dimension_semantics<parallel>, #tpu.dimension_semantics<arbitrary>], iteration_bounds = array<i64: 1, 3, 1>, scalar_prefetch = 0 : i64, scratch_operands = 1 : i64, tpu.core_type = #tpu.core_type<tc>, window_params = [{transform_indices = @transform_0, window_bounds = array<i64: 16, 32>}, {transform_indices = @transform_1, window_bounds = array<i64: 32, 128>}, {transform_indices = @transform_2, window_bounds = array<i64: 16, 128>}]} {
    %c0_i32 = arith.constant 0 : i32
    %0 = arith.cmpi eq, %arg2, %c0_i32 : i32
    %1 = arith.extui %0 : i1 to i32
    %c0_i32_0 = arith.constant 0 : i32
    %2 = arith.cmpi ne, %1, %c0_i32_0 : i32
    scf.if %2 {
      %cst_10 = arith.constant 0.000000e+00 : f32
      %14 = vector.broadcast %cst_10 : f32 to vector<16x128xf32>
      %c0_11 = arith.constant 0 : index
      %c0_12 = arith.constant 0 : index
      %15 = vector.load %arg6[%c0_11, %c0_12] : memref<16x128xf32, #tpu.memory_space<vmem>>, vector<16x128xf32>
      tpu.vector_store %arg6[%c0_11, %c0_12], %14 {strides = array<i32>} : memref<16x128xf32, #tpu.memory_space<vmem>>, vector<16x128xf32>,
    } else {
    }
    %c0 = arith.constant 0 : index
    %c0_1 = arith.constant 0 : index
    %3 = vector.load %arg6[%c0, %c0_1] : memref<16x128xf32, #tpu.memory_space<vmem>>, vector<16x128xf32>
    %c0_2 = arith.constant 0 : index
    %c0_3 = arith.constant 0 : index
    %4 = vector.load %arg3[%c0_2, %c0_3] : memref<16x32xf32, #tpu.memory_space<vmem>>, vector<16x32xf32>
    %5 = arith.truncf %4 : vector<16x32xf32> to vector<16x32xbf16>
    %c0_4 = arith.constant 0 : index
    %c0_5 = arith.constant 0 : index
    %6 = vector.load %arg4[%c0_4, %c0_5] : memref<32x128xf32, #tpu.memory_space<vmem>>, vector<32x128xf32>
    %7 = arith.truncf %6 : vector<32x128xf32> to vector<32x128xbf16>
    %cst = arith.constant dense<0.000000e+00> : vector<16x128xf32>
    %8 = tpu.matmul %5, %7, %cst {dimension_numbers = #tpu.dot_dimension_numbers<[1], [0], [0], [1], [0, 0, 1, 1], [], []>} : vector<16x32xbf16>, vector<32x128xbf16>, vector<16x128xf32> -> vector<16x128xf32>
    %9 = arith.addf %3, %8 : vector<16x128xf32>
    %c0_6 = arith.constant 0 : index
    %c0_7 = arith.constant 0 : index
    %10 = vector.load %arg6[%c0_6, %c0_7] : memref<16x128xf32, #tpu.memory_space<vmem>>, vector<16x128xf32>
    tpu.vector_store %arg6[%c0_6, %c0_7], %9 {strides = array<i32>} : memref<16x128xf32, #tpu.memory_space<vmem>>, vector<16x128xf32>,
    %c0_i32_8 = arith.constant 0 : i32
    %11 = arith.cmpi eq, %arg2, %c0_i32_8 : i32
    %12 = arith.extui %11 : i1 to i32
    %c0_i32_9 = arith.constant 0 : i32
    %13 = arith.cmpi ne, %12, %c0_i32_9 : i32
    scf.if %13 {
      %c0_10 = arith.constant 0 : index
      %c0_11 = arith.constant 0 : index
      %14 = vector.load %arg6[%c0_10, %c0_11] : memref<16x128xf32, #tpu.memory_space<vmem>>, vector<16x128xf32>
      %15 = arith.truncf %14 : vector<16x128xf32> to vector<16x128xbf16>
      %c0_12 = arith.constant 0 : index
      %c0_13 = arith.constant 0 : index
      %16 = vector.load %arg5[%c0_12, %c0_13] : memref<16x128xbf16, #tpu.memory_space<vmem>>, vector<16x128xbf16>
      tpu.vector_store %arg5[%c0_12, %c0_13], %15 {strides = array<i32>} : memref<16x128xbf16, #tpu.memory_space<vmem>>, vector<16x128xbf16>,
    } else {
    }
    return
  }
  func.func @transform_0(%arg0: i32, %arg1: i32, %arg2: i32) -> (i32, i32) {
    %c0_i32 = arith.constant 0 : i32
    return %arg0, %arg2 : i32, i32
  }
  func.func @transform_1(%arg0: i32, %arg1: i32, %arg2: i32) -> (i32, i32) {
    %c0_i32 = arith.constant 0 : i32
    return %arg2, %arg1 : i32, i32
  }
  func.func @transform_2(%arg0: i32, %arg1: i32, %arg2: i32) -> (i32, i32) {
    %c0_i32 = arith.constant 0 : i32
    return %arg0, %arg1 : i32, i32
  }
}

module attributes {stable_mosaic.version = 11 : i64} {
  func.func @_flash_attn_kernel(%arg0: i32, %arg1: i32, %arg2: i32, %arg3: memref<1x8x128xbf16, #tpu.memory_space<vmem>>, %arg4: memref<1x8x128xbf16, #tpu.memory_space<vmem>>, %arg5: memref<1x8x128xbf16, #tpu.memory_space<vmem>>, %arg6: memref<1x8x128xbf16, #tpu.memory_space<vmem>>, %arg7: memref<4x8x1xf32, #tpu.memory_space<vmem>>, %arg8: memref<4x8x1xf32, #tpu.memory_space<vmem>>, %arg9: memref<4x8x32xf32, #tpu.memory_space<vmem>>) attributes {dimension_semantics = [#tpu.dimension_semantics<parallel>, #tpu.dimension_semantics<parallel>, #tpu.dimension_semantics<arbitrary>], iteration_bounds = array<i64: 2, 1, 1>, scalar_prefetch = 0 : i64, scratch_operands = 3 : i64, tpu.core_type = #tpu.core_type<tc>, window_params = [{transform_indices = @transform_0, window_bounds = array<i64: 1, 8, 128>}, {transform_indices = @transform_1, window_bounds = array<i64: 1, 8, 128>}, {transform_indices = @transform_2, window_bounds = array<i64: 1, 8, 128>}, {transform_indices = @transform_3, window_bounds = array<i64: 1, 8, 128>}]} {
    %c0_i32 = arith.constant 0 : i32
    %0 = arith.cmpi eq, %arg2, %c0_i32 : i32
    %1 = arith.extui %0 : i1 to i32
    %c0_i32_0 = arith.constant 0 : i32
    %2 = arith.cmpi ne, %1, %c0_i32_0 : i32
    scf.if %2 {
      %cst_119 = arith.constant 0xFF800000 : f32
      %162 = vector.broadcast %cst_119 : f32 to vector<4x8x1xf32>
      %c0_120 = arith.constant 0 : index
      %c0_121 = arith.constant 0 : index
      %c0_122 = arith.constant 0 : index
      %163 = vector.load %arg7[%c0_120, %c0_121, %c0_122] : memref<4x8x1xf32, #tpu.memory_space<vmem>>, vector<4x8x1xf32>
      tpu.vector_store %arg7[%c0_120, %c0_121, %c0_122], %162 {strides = array<i32>} : memref<4x8x1xf32, #tpu.memory_space<vmem>>, vector<4x8x1xf32>,
      %cst_123 = arith.constant 0.000000e+00 : f32
      %164 = vector.broadcast %cst_123 : f32 to vector<4x8x1xf32>
      %c0_124 = arith.constant 0 : index
      %c0_125 = arith.constant 0 : index
      %c0_126 = arith.constant 0 : index
      %165 = vector.load %arg8[%c0_124, %c0_125, %c0_126] : memref<4x8x1xf32, #tpu.memory_space<vmem>>, vector<4x8x1xf32>
      tpu.vector_store %arg8[%c0_124, %c0_125, %c0_126], %164 {strides = array<i32>} : memref<4x8x1xf32, #tpu.memory_space<vmem>>, vector<4x8x1xf32>,
      %cst_127 = arith.constant 0.000000e+00 : f32
      %166 = vector.broadcast %cst_127 : f32 to vector<4x8x32xf32>
      %c0_128 = arith.constant 0 : index
      %c0_129 = arith.constant 0 : index
      %c0_130 = arith.constant 0 : index
      %167 = vector.load %arg9[%c0_128, %c0_129, %c0_130] : memref<4x8x32xf32, #tpu.memory_space<vmem>>, vector<4x8x32xf32>
      tpu.vector_store %arg9[%c0_128, %c0_129, %c0_130], %166 {strides = array<i32>} : memref<4x8x32xf32, #tpu.memory_space<vmem>>, vector<4x8x32xf32>,
    } else {
    }
    %c0 = arith.constant 0 : index
    %c0_1 = arith.constant 0 : index
    %c0_2 = arith.constant 0 : index
    %3 = vector.load %arg3[%c0, %c0_1, %c0_2] : memref<1x8x128xbf16, #tpu.memory_space<vmem>>, vector<1x8x32xbf16>
    %4 = vector.shape_cast %3 : vector<1x8x32xbf16> to vector<8x32xbf16>
    %c0_3 = arith.constant 0 : index
    %c0_4 = arith.constant 0 : index
    %c0_5 = arith.constant 0 : index
    %5 = vector.load %arg4[%c0_3, %c0_4, %c0_5] : memref<1x8x128xbf16, #tpu.memory_space<vmem>>, vector<1x8x32xbf16>
    %6 = vector.shape_cast %5 : vector<1x8x32xbf16> to vector<8x32xbf16>
    %c0_6 = arith.constant 0 : index
    %c0_7 = arith.constant 0 : index
    %c0_8 = arith.constant 0 : index
    %7 = vector.load %arg5[%c0_6, %c0_7, %c0_8] : memref<1x8x128xbf16, #tpu.memory_space<vmem>>, vector<1x8x32xbf16>
    %8 = vector.shape_cast %7 : vector<1x8x32xbf16> to vector<8x32xbf16>
    %cst = arith.constant dense<0.000000e+00> : vector<8x8xf32>
    %9 = tpu.matmul %4, %6, %cst {dimension_numbers = #tpu.dot_dimension_numbers<[1], [1], [0], [0], [0, 0, 1, 0], [], []>} : vector<8x32xbf16>, vector<8x32xbf16>, vector<8x8xf32> -> vector<8x8xf32>
    %c0_9 = arith.constant 0 : index
    %c0_10 = arith.constant 0 : index
    %c0_11 = arith.constant 0 : index
    %10 = vector.load %arg7[%c0_9, %c0_10, %c0_11] : memref<4x8x1xf32, #tpu.memory_space<vmem>>, vector<1x8x1xf32>
    %11 = vector.shape_cast %10 : vector<1x8x1xf32> to vector<8x1xf32>
    %cst_12 = arith.constant dense<0xFF800000> : vector<8xf32>
    %12 = vector.multi_reduction <maximumf>, %9, %cst_12 [1] : vector<8x8xf32> to vector<8xf32>
    %13 = vector.shape_cast %12 : vector<8xf32> to vector<8x1xf32>
    %14 = arith.maximumf %11, %13 : vector<8x1xf32>
    %15 = arith.subf %11, %14 : vector<8x1xf32>
    %16 = math.exp %15 : vector<8x1xf32>
    %17 = vector.broadcast %14 : vector<8x1xf32> to vector<8x8xf32>
    %18 = arith.subf %9, %17 : vector<8x8xf32>
    %19 = math.exp %18 : vector<8x8xf32>
    %c0_13 = arith.constant 0 : index
    %c0_14 = arith.constant 0 : index
    %c0_15 = arith.constant 0 : index
    %20 = vector.load %arg8[%c0_13, %c0_14, %c0_15] : memref<4x8x1xf32, #tpu.memory_space<vmem>>, vector<1x8x1xf32>
    %21 = vector.shape_cast %20 : vector<1x8x1xf32> to vector<8x1xf32>
    %22 = arith.mulf %16, %21 : vector<8x1xf32>
    %cst_16 = arith.constant dense<0.000000e+00> : vector<8xf32>
    %23 = vector.multi_reduction <add>, %19, %cst_16 [1] : vector<8x8xf32> to vector<8xf32>
    %24 = vector.shape_cast %23 : vector<8xf32> to vector<8x1xf32>
    %25 = arith.addf %22, %24 : vector<8x1xf32>
    %c0_17 = arith.constant 0 : index
    %c0_18 = arith.constant 0 : index
    %c0_19 = arith.constant 0 : index
    %26 = vector.load %arg8[%c0_17, %c0_18, %c0_19] : memref<4x8x1xf32, #tpu.memory_space<vmem>>, vector<1x8x1xf32>
    %27 = vector.shape_cast %26 : vector<1x8x1xf32> to vector<8x1xf32>
    %28 = vector.shape_cast %25 : vector<8x1xf32> to vector<1x8x1xf32>
    tpu.vector_store %arg8[%c0_17, %c0_18, %c0_19], %28 {strides = array<i32>} : memref<4x8x1xf32, #tpu.memory_space<vmem>>, vector<1x8x1xf32>,
    %c0_20 = arith.constant 0 : index
    %c0_21 = arith.constant 0 : index
    %c0_22 = arith.constant 0 : index
    %29 = vector.load %arg9[%c0_20, %c0_21, %c0_22] : memref<4x8x32xf32, #tpu.memory_space<vmem>>, vector<1x8x32xf32>
    %30 = vector.shape_cast %29 : vector<1x8x32xf32> to vector<8x32xf32>
    %31 = vector.broadcast %16 : vector<8x1xf32> to vector<8x32xf32>
    %32 = arith.mulf %31, %30 : vector<8x32xf32>
    %33 = arith.truncf %19 : vector<8x8xf32> to vector<8x8xbf16>
    %cst_23 = arith.constant dense<0.000000e+00> : vector<8x32xf32>
    %34 = tpu.matmul %33, %8, %cst_23 {dimension_numbers = #tpu.dot_dimension_numbers<[1], [0], [0], [1], [0, 0, 1, 1], [], []>} : vector<8x8xbf16>, vector<8x32xbf16>, vector<8x32xf32> -> vector<8x32xf32>
    %35 = arith.addf %32, %34 : vector<8x32xf32>
    %c0_24 = arith.constant 0 : index
    %c0_25 = arith.constant 0 : index
    %c0_26 = arith.constant 0 : index
    %36 = vector.load %arg9[%c0_24, %c0_25, %c0_26] : memref<4x8x32xf32, #tpu.memory_space<vmem>>, vector<1x8x32xf32>
    %37 = vector.shape_cast %36 : vector<1x8x32xf32> to vector<8x32xf32>
    %38 = vector.shape_cast %35 : vector<8x32xf32> to vector<1x8x32xf32>
    tpu.vector_store %arg9[%c0_24, %c0_25, %c0_26], %38 {strides = array<i32>} : memref<4x8x32xf32, #tpu.memory_space<vmem>>, vector<1x8x32xf32>,
    %c0_27 = arith.constant 0 : index
    %c0_28 = arith.constant 0 : index
    %c0_29 = arith.constant 0 : index
    %39 = vector.load %arg7[%c0_27, %c0_28, %c0_29] : memref<4x8x1xf32, #tpu.memory_space<vmem>>, vector<1x8x1xf32>
    %40 = vector.shape_cast %39 : vector<1x8x1xf32> to vector<8x1xf32>
    %41 = vector.shape_cast %14 : vector<8x1xf32> to vector<1x8x1xf32>
    tpu.vector_store %arg7[%c0_27, %c0_28, %c0_29], %41 {strides = array<i32>} : memref<4x8x1xf32, #tpu.memory_space<vmem>>, vector<1x8x1xf32>,
    %c0_30 = arith.constant 0 : index
    %c0_31 = arith.constant 0 : index
    %c32 = arith.constant 32 : index
    %42 = vector.load %arg3[%c0_30, %c0_31, %c32] : memref<1x8x128xbf16, #tpu.memory_space<vmem>>, vector<1x8x32xbf16>
    %43 = vector.shape_cast %42 : vector<1x8x32xbf16> to vector<8x32xbf16>
    %c0_32 = arith.constant 0 : index
    %c0_33 = arith.constant 0 : index
    %c32_34 = arith.constant 32 : index
    %44 = vector.load %arg4[%c0_32, %c0_33, %c32_34] : memref<1x8x128xbf16, #tpu.memory_space<vmem>>, vector<1x8x32xbf16>
    %45 = vector.shape_cast %44 : vector<1x8x32xbf16> to vector<8x32xbf16>
    %c0_35 = arith.constant 0 : index
    %c0_36 = arith.constant 0 : index
    %c32_37 = arith.constant 32 : index
    %46 = vector.load %arg5[%c0_35, %c0_36, %c32_37] : memref<1x8x128xbf16, #tpu.memory_space<vmem>>, vector<1x8x32xbf16>
    %47 = vector.shape_cast %46 : vector<1x8x32xbf16> to vector<8x32xbf16>
    %cst_38 = arith.constant dense<0.000000e+00> : vector<8x8xf32>
    %48 = tpu.matmul %43, %45, %cst_38 {dimension_numbers = #tpu.dot_dimension_numbers<[1], [1], [0], [0], [0, 0, 1, 0], [], []>} : vector<8x32xbf16>, vector<8x32xbf16>, vector<8x8xf32> -> vector<8x8xf32>
    %c1 = arith.constant 1 : index
    %c0_39 = arith.constant 0 : index
    %c0_40 = arith.constant 0 : index
    %49 = vector.load %arg7[%c1, %c0_39, %c0_40] : memref<4x8x1xf32, #tpu.memory_space<vmem>>, vector<1x8x1xf32>
    %50 = vector.shape_cast %49 : vector<1x8x1xf32> to vector<8x1xf32>
    %cst_41 = arith.constant dense<0xFF800000> : vector<8xf32>
    %51 = vector.multi_reduction <maximumf>, %48, %cst_41 [1] : vector<8x8xf32> to vector<8xf32>
    %52 = vector.shape_cast %51 : vector<8xf32> to vector<8x1xf32>
    %53 = arith.maximumf %50, %52 : vector<8x1xf32>
    %54 = arith.subf %50, %53 : vector<8x1xf32>
    %55 = math.exp %54 : vector<8x1xf32>
    %56 = vector.broadcast %53 : vector<8x1xf32> to vector<8x8xf32>
    %57 = arith.subf %48, %56 : vector<8x8xf32>
    %58 = math.exp %57 : vector<8x8xf32>
    %c1_42 = arith.constant 1 : index
    %c0_43 = arith.constant 0 : index
    %c0_44 = arith.constant 0 : index
    %59 = vector.load %arg8[%c1_42, %c0_43, %c0_44] : memref<4x8x1xf32, #tpu.memory_space<vmem>>, vector<1x8x1xf32>
    %60 = vector.shape_cast %59 : vector<1x8x1xf32> to vector<8x1xf32>
    %61 = arith.mulf %55, %60 : vector<8x1xf32>
    %cst_45 = arith.constant dense<0.000000e+00> : vector<8xf32>
    %62 = vector.multi_reduction <add>, %58, %cst_45 [1] : vector<8x8xf32> to vector<8xf32>
    %63 = vector.shape_cast %62 : vector<8xf32> to vector<8x1xf32>
    %64 = arith.addf %61, %63 : vector<8x1xf32>
    %c1_46 = arith.constant 1 : index
    %c0_47 = arith.constant 0 : index
    %c0_48 = arith.constant 0 : index
    %65 = vector.load %arg8[%c1_46, %c0_47, %c0_48] : memref<4x8x1xf32, #tpu.memory_space<vmem>>, vector<1x8x1xf32>
    %66 = vector.shape_cast %65 : vector<1x8x1xf32> to vector<8x1xf32>
    %67 = vector.shape_cast %64 : vector<8x1xf32> to vector<1x8x1xf32>
    tpu.vector_store %arg8[%c1_46, %c0_47, %c0_48], %67 {strides = array<i32>} : memref<4x8x1xf32, #tpu.memory_space<vmem>>, vector<1x8x1xf32>,
    %c1_49 = arith.constant 1 : index
    %c0_50 = arith.constant 0 : index
    %c0_51 = arith.constant 0 : index
    %68 = vector.load %arg9[%c1_49, %c0_50, %c0_51] : memref<4x8x32xf32, #tpu.memory_space<vmem>>, vector<1x8x32xf32>
    %69 = vector.shape_cast %68 : vector<1x8x32xf32> to vector<8x32xf32>
    %70 = vector.broadcast %55 : vector<8x1xf32> to vector<8x32xf32>
    %71 = arith.mulf %70, %69 : vector<8x32xf32>
    %72 = arith.truncf %58 : vector<8x8xf32> to vector<8x8xbf16>
    %cst_52 = arith.constant dense<0.000000e+00> : vector<8x32xf32>
    %73 = tpu.matmul %72, %47, %cst_52 {dimension_numbers = #tpu.dot_dimension_numbers<[1], [0], [0], [1], [0, 0, 1, 1], [], []>} : vector<8x8xbf16>, vector<8x32xbf16>, vector<8x32xf32> -> vector<8x32xf32>
    %74 = arith.addf %71, %73 : vector<8x32xf32>
    %c1_53 = arith.constant 1 : index
    %c0_54 = arith.constant 0 : index
    %c0_55 = arith.constant 0 : index
    %75 = vector.load %arg9[%c1_53, %c0_54, %c0_55] : memref<4x8x32xf32, #tpu.memory_space<vmem>>, vector<1x8x32xf32>
    %76 = vector.shape_cast %75 : vector<1x8x32xf32> to vector<8x32xf32>
    %77 = vector.shape_cast %74 : vector<8x32xf32> to vector<1x8x32xf32>
    tpu.vector_store %arg9[%c1_53, %c0_54, %c0_55], %77 {strides = array<i32>} : memref<4x8x32xf32, #tpu.memory_space<vmem>>, vector<1x8x32xf32>,
    %c1_56 = arith.constant 1 : index
    %c0_57 = arith.constant 0 : index
    %c0_58 = arith.constant 0 : index
    %78 = vector.load %arg7[%c1_56, %c0_57, %c0_58] : memref<4x8x1xf32, #tpu.memory_space<vmem>>, vector<1x8x1xf32>
    %79 = vector.shape_cast %78 : vector<1x8x1xf32> to vector<8x1xf32>
    %80 = vector.shape_cast %53 : vector<8x1xf32> to vector<1x8x1xf32>
    tpu.vector_store %arg7[%c1_56, %c0_57, %c0_58], %80 {strides = array<i32>} : memref<4x8x1xf32, #tpu.memory_space<vmem>>, vector<1x8x1xf32>,
    %c0_59 = arith.constant 0 : index
    %c0_60 = arith.constant 0 : index
    %c64 = arith.constant 64 : index
    %81 = vector.load %arg3[%c0_59, %c0_60, %c64] : memref<1x8x128xbf16, #tpu.memory_space<vmem>>, vector<1x8x32xbf16>
    %82 = vector.shape_cast %81 : vector<1x8x32xbf16> to vector<8x32xbf16>
    %c0_61 = arith.constant 0 : index
    %c0_62 = arith.constant 0 : index
    %c64_63 = arith.constant 64 : index
    %83 = vector.load %arg4[%c0_61, %c0_62, %c64_63] : memref<1x8x128xbf16, #tpu.memory_space<vmem>>, vector<1x8x32xbf16>
    %84 = vector.shape_cast %83 : vector<1x8x32xbf16> to vector<8x32xbf16>
    %c0_64 = arith.constant 0 : index
    %c0_65 = arith.constant 0 : index
    %c64_66 = arith.constant 64 : index
    %85 = vector.load %arg5[%c0_64, %c0_65, %c64_66] : memref<1x8x128xbf16, #tpu.memory_space<vmem>>, vector<1x8x32xbf16>
    %86 = vector.shape_cast %85 : vector<1x8x32xbf16> to vector<8x32xbf16>
    %cst_67 = arith.constant dense<0.000000e+00> : vector<8x8xf32>
    %87 = tpu.matmul %82, %84, %cst_67 {dimension_numbers = #tpu.dot_dimension_numbers<[1], [1], [0], [0], [0, 0, 1, 0], [], []>} : vector<8x32xbf16>, vector<8x32xbf16>, vector<8x8xf32> -> vector<8x8xf32>
    %c2 = arith.constant 2 : index
    %c0_68 = arith.constant 0 : index
    %c0_69 = arith.constant 0 : index
    %88 = vector.load %arg7[%c2, %c0_68, %c0_69] : memref<4x8x1xf32, #tpu.memory_space<vmem>>, vector<1x8x1xf32>
    %89 = vector.shape_cast %88 : vector<1x8x1xf32> to vector<8x1xf32>
    %cst_70 = arith.constant dense<0xFF800000> : vector<8xf32>
    %90 = vector.multi_reduction <maximumf>, %87, %cst_70 [1] : vector<8x8xf32> to vector<8xf32>
    %91 = vector.shape_cast %90 : vector<8xf32> to vector<8x1xf32>
    %92 = arith.maximumf %89, %91 : vector<8x1xf32>
    %93 = arith.subf %89, %92 : vector<8x1xf32>
    %94 = math.exp %93 : vector<8x1xf32>
    %95 = vector.broadcast %92 : vector<8x1xf32> to vector<8x8xf32>
    %96 = arith.subf %87, %95 : vector<8x8xf32>
    %97 = math.exp %96 : vector<8x8xf32>
    %c2_71 = arith.constant 2 : index
    %c0_72 = arith.constant 0 : index
    %c0_73 = arith.constant 0 : index
    %98 = vector.load %arg8[%c2_71, %c0_72, %c0_73] : memref<4x8x1xf32, #tpu.memory_space<vmem>>, vector<1x8x1xf32>
    %99 = vector.shape_cast %98 : vector<1x8x1xf32> to vector<8x1xf32>
    %100 = arith.mulf %94, %99 : vector<8x1xf32>
    %cst_74 = arith.constant dense<0.000000e+00> : vector<8xf32>
    %101 = vector.multi_reduction <add>, %97, %cst_74 [1] : vector<8x8xf32> to vector<8xf32>
    %102 = vector.shape_cast %101 : vector<8xf32> to vector<8x1xf32>
    %103 = arith.addf %100, %102 : vector<8x1xf32>
    %c2_75 = arith.constant 2 : index
    %c0_76 = arith.constant 0 : index
    %c0_77 = arith.constant 0 : index
    %104 = vector.load %arg8[%c2_75, %c0_76, %c0_77] : memref<4x8x1xf32, #tpu.memory_space<vmem>>, vector<1x8x1xf32>
    %105 = vector.shape_cast %104 : vector<1x8x1xf32> to vector<8x1xf32>
    %106 = vector.shape_cast %103 : vector<8x1xf32> to vector<1x8x1xf32>
    tpu.vector_store %arg8[%c2_75, %c0_76, %c0_77], %106 {strides = array<i32>} : memref<4x8x1xf32, #tpu.memory_space<vmem>>, vector<1x8x1xf32>,
    %c2_78 = arith.constant 2 : index
    %c0_79 = arith.constant 0 : index
    %c0_80 = arith.constant 0 : index
    %107 = vector.load %arg9[%c2_78, %c0_79, %c0_80] : memref<4x8x32xf32, #tpu.memory_space<vmem>>, vector<1x8x32xf32>
    %108 = vector.shape_cast %107 : vector<1x8x32xf32> to vector<8x32xf32>
    %109 = vector.broadcast %94 : vector<8x1xf32> to vector<8x32xf32>
    %110 = arith.mulf %109, %108 : vector<8x32xf32>
    %111 = arith.truncf %97 : vector<8x8xf32> to vector<8x8xbf16>
    %cst_81 = arith.constant dense<0.000000e+00> : vector<8x32xf32>
    %112 = tpu.matmul %111, %86, %cst_81 {dimension_numbers = #tpu.dot_dimension_numbers<[1], [0], [0], [1], [0, 0, 1, 1], [], []>} : vector<8x8xbf16>, vector<8x32xbf16>, vector<8x32xf32> -> vector<8x32xf32>
    %113 = arith.addf %110, %112 : vector<8x32xf32>
    %c2_82 = arith.constant 2 : index
    %c0_83 = arith.constant 0 : index
    %c0_84 = arith.constant 0 : index
    %114 = vector.load %arg9[%c2_82, %c0_83, %c0_84] : memref<4x8x32xf32, #tpu.memory_space<vmem>>, vector<1x8x32xf32>
    %115 = vector.shape_cast %114 : vector<1x8x32xf32> to vector<8x32xf32>
    %116 = vector.shape_cast %113 : vector<8x32xf32> to vector<1x8x32xf32>
    tpu.vector_store %arg9[%c2_82, %c0_83, %c0_84], %116 {strides = array<i32>} : memref<4x8x32xf32, #tpu.memory_space<vmem>>, vector<1x8x32xf32>,
    %c2_85 = arith.constant 2 : index
    %c0_86 = arith.constant 0 : index
    %c0_87 = arith.constant 0 : index
    %117 = vector.load %arg7[%c2_85, %c0_86, %c0_87] : memref<4x8x1xf32, #tpu.memory_space<vmem>>, vector<1x8x1xf32>
    %118 = vector.shape_cast %117 : vector<1x8x1xf32> to vector<8x1xf32>
    %119 = vector.shape_cast %92 : vector<8x1xf32> to vector<1x8x1xf32>
    tpu.vector_store %arg7[%c2_85, %c0_86, %c0_87], %119 {strides = array<i32>} : memref<4x8x1xf32, #tpu.memory_space<vmem>>, vector<1x8x1xf32>,
    %c0_88 = arith.constant 0 : index
    %c0_89 = arith.constant 0 : index
    %c96 = arith.constant 96 : index
    %120 = vector.load %arg3[%c0_88, %c0_89, %c96] : memref<1x8x128xbf16, #tpu.memory_space<vmem>>, vector<1x8x32xbf16>
    %121 = vector.shape_cast %120 : vector<1x8x32xbf16> to vector<8x32xbf16>
    %c0_90 = arith.constant 0 : index
    %c0_91 = arith.constant 0 : index
    %c96_92 = arith.constant 96 : index
    %122 = vector.load %arg4[%c0_90, %c0_91, %c96_92] : memref<1x8x128xbf16, #tpu.memory_space<vmem>>, vector<1x8x32xbf16>
    %123 = vector.shape_cast %122 : vector<1x8x32xbf16> to vector<8x32xbf16>
    %c0_93 = arith.constant 0 : index
    %c0_94 = arith.constant 0 : index
    %c96_95 = arith.constant 96 : index
    %124 = vector.load %arg5[%c0_93, %c0_94, %c96_95] : memref<1x8x128xbf16, #tpu.memory_space<vmem>>, vector<1x8x32xbf16>
    %125 = vector.shape_cast %124 : vector<1x8x32xbf16> to vector<8x32xbf16>
    %cst_96 = arith.constant dense<0.000000e+00> : vector<8x8xf32>
    %126 = tpu.matmul %121, %123, %cst_96 {dimension_numbers = #tpu.dot_dimension_numbers<[1], [1], [0], [0], [0, 0, 1, 0], [], []>} : vector<8x32xbf16>, vector<8x32xbf16>, vector<8x8xf32> -> vector<8x8xf32>
    %c3 = arith.constant 3 : index
    %c0_97 = arith.constant 0 : index
    %c0_98 = arith.constant 0 : index
    %127 = vector.load %arg7[%c3, %c0_97, %c0_98] : memref<4x8x1xf32, #tpu.memory_space<vmem>>, vector<1x8x1xf32>
    %128 = vector.shape_cast %127 : vector<1x8x1xf32> to vector<8x1xf32>
    %cst_99 = arith.constant dense<0xFF800000> : vector<8xf32>
    %129 = vector.multi_reduction <maximumf>, %126, %cst_99 [1] : vector<8x8xf32> to vector<8xf32>
    %130 = vector.shape_cast %129 : vector<8xf32> to vector<8x1xf32>
    %131 = arith.maximumf %128, %130 : vector<8x1xf32>
    %132 = arith.subf %128, %131 : vector<8x1xf32>
    %133 = math.exp %132 : vector<8x1xf32>
    %134 = vector.broadcast %131 : vector<8x1xf32> to vector<8x8xf32>
    %135 = arith.subf %126, %134 : vector<8x8xf32>
    %136 = math.exp %135 : vector<8x8xf32>
    %c3_100 = arith.constant 3 : index
    %c0_101 = arith.constant 0 : index
    %c0_102 = arith.constant 0 : index
    %137 = vector.load %arg8[%c3_100, %c0_101, %c0_102] : memref<4x8x1xf32, #tpu.memory_space<vmem>>, vector<1x8x1xf32>
    %138 = vector.shape_cast %137 : vector<1x8x1xf32> to vector<8x1xf32>
    %139 = arith.mulf %133, %138 : vector<8x1xf32>
    %cst_103 = arith.constant dense<0.000000e+00> : vector<8xf32>
    %140 = vector.multi_reduction <add>, %136, %cst_103 [1] : vector<8x8xf32> to vector<8xf32>
    %141 = vector.shape_cast %140 : vector<8xf32> to vector<8x1xf32>
    %142 = arith.addf %139, %141 : vector<8x1xf32>
    %c3_104 = arith.constant 3 : index
    %c0_105 = arith.constant 0 : index
    %c0_106 = arith.constant 0 : index
    %143 = vector.load %arg8[%c3_104, %c0_105, %c0_106] : memref<4x8x1xf32, #tpu.memory_space<vmem>>, vector<1x8x1xf32>
    %144 = vector.shape_cast %143 : vector<1x8x1xf32> to vector<8x1xf32>
    %145 = vector.shape_cast %142 : vector<8x1xf32> to vector<1x8x1xf32>
    tpu.vector_store %arg8[%c3_104, %c0_105, %c0_106], %145 {strides = array<i32>} : memref<4x8x1xf32, #tpu.memory_space<vmem>>, vector<1x8x1xf32>,
    %c3_107 = arith.constant 3 : index
    %c0_108 = arith.constant 0 : index
    %c0_109 = arith.constant 0 : index
    %146 = vector.load %arg9[%c3_107, %c0_108, %c0_109] : memref<4x8x32xf32, #tpu.memory_space<vmem>>, vector<1x8x32xf32>
    %147 = vector.shape_cast %146 : vector<1x8x32xf32> to vector<8x32xf32>
    %148 = vector.broadcast %133 : vector<8x1xf32> to vector<8x32xf32>
    %149 = arith.mulf %148, %147 : vector<8x32xf32>
    %150 = arith.truncf %136 : vector<8x8xf32> to vector<8x8xbf16>
    %cst_110 = arith.constant dense<0.000000e+00> : vector<8x32xf32>
    %151 = tpu.matmul %150, %125, %cst_110 {dimension_numbers = #tpu.dot_dimension_numbers<[1], [0], [0], [1], [0, 0, 1, 1], [], []>} : vector<8x8xbf16>, vector<8x32xbf16>, vector<8x32xf32> -> vector<8x32xf32>
    %152 = arith.addf %149, %151 : vector<8x32xf32>
    %c3_111 = arith.constant 3 : index
    %c0_112 = arith.constant 0 : index
    %c0_113 = arith.constant 0 : index
    %153 = vector.load %arg9[%c3_111, %c0_112, %c0_113] : memref<4x8x32xf32, #tpu.memory_space<vmem>>, vector<1x8x32xf32>
    %154 = vector.shape_cast %153 : vector<1x8x32xf32> to vector<8x32xf32>
    %155 = vector.shape_cast %152 : vector<8x32xf32> to vector<1x8x32xf32>
    tpu.vector_store %arg9[%c3_111, %c0_112, %c0_113], %155 {strides = array<i32>} : memref<4x8x32xf32, #tpu.memory_space<vmem>>, vector<1x8x32xf32>,
    %c3_114 = arith.constant 3 : index
    %c0_115 = arith.constant 0 : index
    %c0_116 = arith.constant 0 : index
    %156 = vector.load %arg7[%c3_114, %c0_115, %c0_116] : memref<4x8x1xf32, #tpu.memory_space<vmem>>, vector<1x8x1xf32>
    %157 = vector.shape_cast %156 : vector<1x8x1xf32> to vector<8x1xf32>
    %158 = vector.shape_cast %131 : vector<8x1xf32> to vector<1x8x1xf32>
    tpu.vector_store %arg7[%c3_114, %c0_115, %c0_116], %158 {strides = array<i32>} : memref<4x8x1xf32, #tpu.memory_space<vmem>>, vector<1x8x1xf32>,
    %c0_i32_117 = arith.constant 0 : i32
    %159 = arith.cmpi eq, %arg2, %c0_i32_117 : i32
    %160 = arith.extui %159 : i1 to i32
    %c0_i32_118 = arith.constant 0 : i32
    %161 = arith.cmpi ne, %160, %c0_i32_118 : i32
    scf.if %161 {
      %c0_119 = arith.constant 0 : index
      %c0_120 = arith.constant 0 : index
      %c0_121 = arith.constant 0 : index
      %162 = vector.load %arg8[%c0_119, %c0_120, %c0_121] : memref<4x8x1xf32, #tpu.memory_space<vmem>>, vector<1x8x1xf32>
      %163 = vector.shape_cast %162 : vector<1x8x1xf32> to vector<8x1xf32>
      %164 = tpu.reciprocal %163 : vector<8x1xf32> -> vector<8x1xf32>
      %c0_122 = arith.constant 0 : index
      %c0_123 = arith.constant 0 : index
      %c0_124 = arith.constant 0 : index
      %165 = vector.load %arg9[%c0_122, %c0_123, %c0_124] : memref<4x8x32xf32, #tpu.memory_space<vmem>>, vector<1x8x32xf32>
      %166 = vector.shape_cast %165 : vector<1x8x32xf32> to vector<8x32xf32>
      %167 = vector.broadcast %164 : vector<8x1xf32> to vector<8x32xf32>
      %168 = arith.mulf %166, %167 : vector<8x32xf32>
      %c1_125 = arith.constant 1 : index
      %c0_126 = arith.constant 0 : index
      %c0_127 = arith.constant 0 : index
      %169 = vector.load %arg8[%c1_125, %c0_126, %c0_127] : memref<4x8x1xf32, #tpu.memory_space<vmem>>, vector<1x8x1xf32>
      %170 = vector.shape_cast %169 : vector<1x8x1xf32> to vector<8x1xf32>
      %171 = tpu.reciprocal %170 : vector<8x1xf32> -> vector<8x1xf32>
      %c1_128 = arith.constant 1 : index
      %c0_129 = arith.constant 0 : index
      %c0_130 = arith.constant 0 : index
      %172 = vector.load %arg9[%c1_128, %c0_129, %c0_130] : memref<4x8x32xf32, #tpu.memory_space<vmem>>, vector<1x8x32xf32>
      %173 = vector.shape_cast %172 : vector<1x8x32xf32> to vector<8x32xf32>
      %174 = vector.broadcast %171 : vector<8x1xf32> to vector<8x32xf32>
      %175 = arith.mulf %173, %174 : vector<8x32xf32>
      %c2_131 = arith.constant 2 : index
      %c0_132 = arith.constant 0 : index
      %c0_133 = arith.constant 0 : index
      %176 = vector.load %arg8[%c2_131, %c0_132, %c0_133] : memref<4x8x1xf32, #tpu.memory_space<vmem>>, vector<1x8x1xf32>
      %177 = vector.shape_cast %176 : vector<1x8x1xf32> to vector<8x1xf32>
      %178 = tpu.reciprocal %177 : vector<8x1xf32> -> vector<8x1xf32>
      %c2_134 = arith.constant 2 : index
      %c0_135 = arith.constant 0 : index
      %c0_136 = arith.constant 0 : index
      %179 = vector.load %arg9[%c2_134, %c0_135, %c0_136] : memref<4x8x32xf32, #tpu.memory_space<vmem>>, vector<1x8x32xf32>
      %180 = vector.shape_cast %179 : vector<1x8x32xf32> to vector<8x32xf32>
      %181 = vector.broadcast %178 : vector<8x1xf32> to vector<8x32xf32>
      %182 = arith.mulf %180, %181 : vector<8x32xf32>
      %c3_137 = arith.constant 3 : index
      %c0_138 = arith.constant 0 : index
      %c0_139 = arith.constant 0 : index
      %183 = vector.load %arg8[%c3_137, %c0_138, %c0_139] : memref<4x8x1xf32, #tpu.memory_space<vmem>>, vector<1x8x1xf32>
      %184 = vector.shape_cast %183 : vector<1x8x1xf32> to vector<8x1xf32>
      %185 = tpu.reciprocal %184 : vector<8x1xf32> -> vector<8x1xf32>
      %c3_140 = arith.constant 3 : index
      %c0_141 = arith.constant 0 : index
      %c0_142 = arith.constant 0 : index
      %186 = vector.load %arg9[%c3_140, %c0_141, %c0_142] : memref<4x8x32xf32, #tpu.memory_space<vmem>>, vector<1x8x32xf32>
      %187 = vector.shape_cast %186 : vector<1x8x32xf32> to vector<8x32xf32>
      %188 = vector.broadcast %185 : vector<8x1xf32> to vector<8x32xf32>
      %189 = arith.mulf %187, %188 : vector<8x32xf32>
      %190 = tpu.concatenate %168, %175, %182, %189 in 1 : vector<8x32xf32>, vector<8x32xf32>, vector<8x32xf32>, vector<8x32xf32> -> vector<8x128xf32>
      %191 = arith.truncf %190 : vector<8x128xf32> to vector<8x128xbf16>
      %c0_143 = arith.constant 0 : index
      %c0_144 = arith.constant 0 : index
      %c0_145 = arith.constant 0 : index
      %192 = vector.load %arg6[%c0_143, %c0_144, %c0_145] : memref<1x8x128xbf16, #tpu.memory_space<vmem>>, vector<1x8x128xbf16>
      %193 = vector.shape_cast %192 : vector<1x8x128xbf16> to vector<8x128xbf16>
      %194 = vector.shape_cast %191 : vector<8x128xbf16> to vector<1x8x128xbf16>
      tpu.vector_store %arg6[%c0_143, %c0_144, %c0_145], %194 {strides = array<i32>} : memref<1x8x128xbf16, #tpu.memory_space<vmem>>, vector<1x8x128xbf16>,
    } else {
    }
    return
  }
  func.func @transform_0(%arg0: i32, %arg1: i32, %arg2: i32) -> (i32, i32, i32) {
    %c0_i32 = arith.constant 0 : i32
    %c0_i32_0 = arith.constant 0 : i32
    return %arg0, %arg1, %c0_i32 : i32, i32, i32
  }
  func.func @transform_1(%arg0: i32, %arg1: i32, %arg2: i32) -> (i32, i32, i32) {
    %c1_i32 = arith.constant 1 : i32
    %c0_i32 = arith.constant 0 : i32
    return %arg0, %arg2, %c1_i32 : i32, i32, i32
  }
  func.func @transform_2(%arg0: i32, %arg1: i32, %arg2: i32) -> (i32, i32, i32) {
    %c2_i32 = arith.constant 2 : i32
    %c0_i32 = arith.constant 0 : i32
    return %arg0, %arg2, %c2_i32 : i32, i32, i32
  }
  func.func @transform_3(%arg0: i32, %arg1: i32, %arg2: i32) -> (i32, i32, i32) {
    %c0_i32 = arith.constant 0 : i32
    %c0_i32_0 = arith.constant 0 : i32
    return %arg0, %arg1, %c0_i32 : i32, i32, i32
  }
}

module attributes {stable_mosaic.version = 11 : i64} {
  func.func @_matmul_bias_kernel(%arg0: i32, %arg1: i32, %arg2: i32, %arg3: memref<16x128xbf16, #tpu.memory_space<vmem>>, %arg4: memref<128x32xf32, #tpu.memory_space<vmem>>, %arg5: memref<1x32xf32, #tpu.memory_space<vmem>>, %arg6: memref<16x32xf32, #tpu.memory_space<vmem>>, %arg7: memref<16x32xf32, #tpu.memory_space<vmem>>) attributes {dimension_semantics = [#tpu.dimension_semantics<parallel>, #tpu.dimension_semantics<parallel>, #tpu.dimension_semantics<arbitrary>], iteration_bounds = array<i64: 1, 1, 1>, scalar_prefetch = 0 : i64, scratch_operands = 1 : i64, tpu.core_type = #tpu.core_type<tc>, window_params = [{transform_indices = @transform_0, window_bounds = array<i64: 16, 128>}, {transform_indices = @transform_1, window_bounds = array<i64: 128, 32>}, {transform_indices = @transform_2, window_bounds = array<i64: 1, 32>}, {transform_indices = @transform_3, window_bounds = array<i64: 16, 32>}]} {
    %c0_i32 = arith.constant 0 : i32
    %0 = arith.cmpi eq, %arg2, %c0_i32 : i32
    %1 = arith.extui %0 : i1 to i32
    %c0_i32_0 = arith.constant 0 : i32
    %2 = arith.cmpi ne, %1, %c0_i32_0 : i32
    scf.if %2 {
      %cst_10 = arith.constant 0.000000e+00 : f32
      %13 = vector.broadcast %cst_10 : f32 to vector<16x32xf32>
      %c0_11 = arith.constant 0 : index
      %c0_12 = arith.constant 0 : index
      %14 = vector.load %arg7[%c0_11, %c0_12] : memref<16x32xf32, #tpu.memory_space<vmem>>, vector<16x32xf32>
      tpu.vector_store %arg7[%c0_11, %c0_12], %13 {strides = array<i32>} : memref<16x32xf32, #tpu.memory_space<vmem>>, vector<16x32xf32>,
    } else {
    }
    %c0 = arith.constant 0 : index
    %c0_1 = arith.constant 0 : index
    %3 = vector.load %arg7[%c0, %c0_1] : memref<16x32xf32, #tpu.memory_space<vmem>>, vector<16x32xf32>
    %c0_2 = arith.constant 0 : index
    %c0_3 = arith.constant 0 : index
    %4 = vector.load %arg3[%c0_2, %c0_3] : memref<16x128xbf16, #tpu.memory_space<vmem>>, vector<16x128xbf16>
    %c0_4 = arith.constant 0 : index
    %c0_5 = arith.constant 0 : index
    %5 = vector.load %arg4[%c0_4, %c0_5] : memref<128x32xf32, #tpu.memory_space<vmem>>, vector<128x32xf32>
    %6 = arith.truncf %5 : vector<128x32xf32> to vector<128x32xbf16>
    %cst = arith.constant dense<0.000000e+00> : vector<16x32xf32>
    %7 = tpu.matmul %4, %6, %cst {dimension_numbers = #tpu.dot_dimension_numbers<[1], [0], [0], [1], [0, 0, 1, 1], [], []>} : vector<16x128xbf16>, vector<128x32xbf16>, vector<16x32xf32> -> vector<16x32xf32>
    %8 = arith.addf %3, %7 : vector<16x32xf32>
    %c0_6 = arith.constant 0 : index
    %c0_7 = arith.constant 0 : index
    %9 = vector.load %arg7[%c0_6, %c0_7] : memref<16x32xf32, #tpu.memory_space<vmem>>, vector<16x32xf32>
    tpu.vector_store %arg7[%c0_6, %c0_7], %8 {strides = array<i32>} : memref<16x32xf32, #tpu.memory_space<vmem>>, vector<16x32xf32>,
    %c0_i32_8 = arith.constant 0 : i32
    %10 = arith.cmpi eq, %arg2, %c0_i32_8 : i32
    %11 = arith.extui %10 : i1 to i32
    %c0_i32_9 = arith.constant 0 : i32
    %12 = arith.cmpi ne, %11, %c0_i32_9 : i32
    scf.if %12 {
      %c0_10 = arith.constant 0 : index
      %c0_11 = arith.constant 0 : index
      %13 = vector.load %arg7[%c0_10, %c0_11] : memref<16x32xf32, #tpu.memory_space<vmem>>, vector<16x32xf32>
      %c0_12 = arith.constant 0 : index
      %c0_13 = arith.constant 0 : index
      %14 = vector.load %arg5[%c0_12, %c0_13] : memref<1x32xf32, #tpu.memory_space<vmem>>, vector<1x32xf32>
      %15 = vector.broadcast %14 : vector<1x32xf32> to vector<16x32xf32>
      %16 = arith.addf %13, %15 : vector<16x32xf32>
      %c0_14 = arith.constant 0 : index
      %c0_15 = arith.constant 0 : index
      %17 = vector.load %arg6[%c0_14, %c0_15] : memref<16x32xf32, #tpu.memory_space<vmem>>, vector<16x32xf32>
      tpu.vector_store %arg6[%c0_14, %c0_15], %16 {strides = array<i32>} : memref<16x32xf32, #tpu.memory_space<vmem>>, vector<16x32xf32>,
    } else {
    }
    return
  }
  func.func @transform_0(%arg0: i32, %arg1: i32, %arg2: i32) -> (i32, i32) {
    %c0_i32 = arith.constant 0 : i32
    return %arg0, %arg2 : i32, i32
  }
  func.func @transform_1(%arg0: i32, %arg1: i32, %arg2: i32) -> (i32, i32) {
    %c0_i32 = arith.constant 0 : i32
    return %arg2, %arg1 : i32, i32
  }
  func.func @transform_2(%arg0: i32, %arg1: i32, %arg2: i32) -> (i32, i32) {
    %c0_i32 = arith.constant 0 : i32
    %c0_i32_0 = arith.constant 0 : i32
    return %c0_i32, %arg1 : i32, i32
  }
  func.func @transform_3(%arg0: i32, %arg1: i32, %arg2: i32) -> (i32, i32) {
    %c0_i32 = arith.constant 0 : i32
    return %arg0, %arg1 : i32, i32
  }
}

</mosaic_0001>

<llo_original>
// kernel: attention_forward.3
$region0: #{attention_forward.3}
  #allocation0 [shape = 'u32[]', space=smem, size = 0x4, offset = 0x4, fixed_abs, tag = 'smem constant byte address 0x4 - core index']
  #allocation1 [shape = 'u32[72,128]{1,0:T(1,128)}', space=vmem, size = 0x9000, scoped, tag = 'internal scratch']
  #allocation2 [shape = 'f32[16,128]{1,0:T(8,128)}', space=vmem, size = 0x2000, scoped, tag = 'scratch operand']
  %s0 = inlined_call_operand.vmem [shape: f32[16,32], index: 0, kind: input, shape index: {}]
  %s1 = inlined_call_operand.vmem [shape: f32[32,384], index: 1, kind: input, shape index: {}]
  %s2 = inlined_call_operand.vmem [shape: bf16[16,384], index: 2, kind: output, shape index: {}]
  %s3 = sld [smem:[#allocation0]]
  $region124: #{attention_forward.3} parent=0
    _
  %s5 = ssub.s32 1, %s3
  %s6 = scalar_select 0, %s5, %s3
  $region1: #{attention_forward.3} parent=0
    #allocation3 [shape = 'u8[32768]{0}', space=vmem, size = 0x8000, scoped, tag = 'input window, operand 1']
    #allocation4 [shape = 'u8[8192]{0}', space=vmem, size = 0x2000, scoped, tag = 'output window, operand 0']
    loop: start=0, step=1, limit=5
    $region2: #{attention_forward.3} parent=1 // loop_pre_header
      _
    $region3: #{attention_forward.3} parent=1 // loop_header
      %s8 = sphi 0, %s12
      %p9 = scmp.ge.s32.totalorder %s8, 5
      %s15 = sphi 0, %s34
      %s16 = sphi 0, %s30
      %s17 = sphi 0, %s26
      %s18 = sphi 0, %s15
      %s19 = sphi 0, %s16
      %s20 = sphi 0, %s17
      %s21 = sphi 0, %s18
      %s22 = sphi 0, %s19
      %s23 = sphi 0, %s20
      %s39 = sphi 0, %s41
      %s42 = sphi 0, %s39
      %s43 = sphi 0, %s42
      %s59 = sphi 0, %s43
      %s67 = sphi 0, %s69
      %s70 = sphi 0, %s67
      %s71 = sphi 0, %s70
      %s87 = sphi 0, %s71
      %s95 = sphi 0, %s97
      %s98 = sphi 0, %s95
      %s99 = sphi 0, %s98
      %s115 = sphi 0, %s99
    $region4: #{attention_forward.3} parent=1 // loop_header_branch
      %11 = sbr.rel (%p9) target = $region8
    $region5: #{attention_forward.3} parent=1 // loop_body
      %s13 = ssub.s32 %s8, 1
      %s14 = ssub.s32 %s8, 2
      %s24 = sadd.s32 1, %s17
      %p25 = scmp.ge.s32.totalorder %s24, 1
      %s26 = scalar_select %p25, 0, %s24
      %s27 = sadd.s32 1, %s16
      %s28 = scalar_select %p25, %s27, %s16
      %p29 = scmp.ge.s32.totalorder %s28, 3
      %s30 = scalar_select %p29, 0, %s28
      %s31 = sadd.s32 1, %s15
      %s32 = scalar_select %p29, %s31, %s15
      %p33 = scmp.ge.s32.totalorder %s32, 1
      %s34 = scalar_select %p33, 0, %s32
      %s35 = ssub.s32 %s15, %s34
      %s36 = ssub.s32 %s17, %s26
      %s37 = sor.u32 %s35, %s36
      %p38 = scmp.eq.s32.totalorder %s37, 0
      %s40 = sadd.s32 %s39, 1
      %s41 = scalar_select %p38, %s39, %s40
      %p44 = pneg %p38
      %p45 = scmp.eq.s32.totalorder %s8, 2
      %p46 = por %p44, %p45
      %p47 = scmp.ne.s32.totalorder %s39, %s42
      %p48 = scmp.eq.s32.totalorder %s8, 0
      %p49 = por %p47, %p48
      %p50 = scmp.ne.s32.totalorder %s39, %s42
      %p51 = scmp.eq.s32.totalorder %s13, 2
      %p52 = por %p50, %p51
      %p53 = scmp.ne.s32.totalorder %s42, %s43
      %p54 = scmp.eq.s32.totalorder %s13, 0
      %p55 = por %p53, %p54
      %p56 = scmp.ne.s32.totalorder %s42, %s43
      %p57 = scmp.eq.s32.totalorder %s14, 2
      %p58 = por %p56, %p57
      %p60 = scmp.ne.s32.totalorder %s43, %s59
      %p61 = scmp.eq.s32.totalorder %s14, 0
      %p62 = por %p60, %p61
      %s63 = ssub.s32 %s17, %s26
      %s64 = ssub.s32 %s16, %s30
      %s65 = sor.u32 %s63, %s64
      %p66 = scmp.eq.s32.totalorder %s65, 0
      %s68 = sadd.s32 %s67, 1
      %s69 = scalar_select %p66, %s67, %s68
      %p72 = pneg %p66
      %p73 = scmp.eq.s32.totalorder %s8, 2
      %p74 = por %p72, %p73
      %p75 = scmp.ne.s32.totalorder %s67, %s70
      %p76 = scmp.eq.s32.totalorder %s8, 0
      %p77 = por %p75, %p76
      %p78 = scmp.ne.s32.totalorder %s67, %s70
      %p79 = scmp.eq.s32.totalorder %s13, 2
      %p80 = por %p78, %p79
      %p81 = scmp.ne.s32.totalorder %s70, %s71
      %p82 = scmp.eq.s32.totalorder %s13, 0
      %p83 = por %p81, %p82
      %p84 = scmp.ne.s32.totalorder %s70, %s71
      %p85 = scmp.eq.s32.totalorder %s14, 2
      %p86 = por %p84, %p85
      %p88 = scmp.ne.s32.totalorder %s71, %s87
      %p89 = scmp.eq.s32.totalorder %s14, 0
      %p90 = por %p88, %p89
      %s91 = ssub.s32 %s15, %s34
      %s92 = ssub.s32 %s16, %s30
      %s93 = sor.u32 %s91, %s92
      %p94 = scmp.eq.s32.totalorder %s93, 0
      %s96 = sadd.s32 %s95, 1
      %s97 = scalar_select %p94, %s95, %s96
      %p100 = pneg %p94
      %p101 = scmp.eq.s32.totalorder %s8, 2
      %p102 = por %p100, %p101
      %p103 = scmp.ne.s32.totalorder %s95, %s98
      %p104 = scmp.eq.s32.totalorder %s8, 0
      %p105 = por %p103, %p104
      %p106 = scmp.ne.s32.totalorder %s95, %s98
      %p107 = scmp.eq.s32.totalorder %s13, 2
      %p108 = por %p106, %p107
      %p109 = scmp.ne.s32.totalorder %s98, %s99
      %p110 = scmp.eq.s32.totalorder %s13, 0
      %p111 = por %p109, %p110
      %p112 = scmp.ne.s32.totalorder %s98, %s99
      %p113 = scmp.eq.s32.totalorder %s14, 2
      %p114 = por %p112, %p113
      %p116 = scmp.ne.s32.totalorder %s99, %s115
      %p117 = scmp.eq.s32.totalorder %s14, 0
      %p118 = por %p116, %p117
      %p119 = scmp.le.s32.totalorder 1, %s8
      %p120 = scmp.lt.s32.totalorder %s8, 4
      %p121 = pnand %p119, %p120
      %p122 = pneg %p121
      // Predicated region
      $region9: #{attention_forward.3} parent=5 // pred_check
        _
      $region10: #{attention_forward.3} parent=5 // pred_check_branch
        %124 = sbr.rel (%p121) target = $region12
      $region11: #{attention_forward.3} parent=5 // pred_region
        %s125 = ssub.s32 %s8, 1
        // Predicated region
        $region13: #{attention_forward.3} parent=11 // pred_check
          %p126 = pneg %p55
        $region14: #{attention_forward.3} parent=11 // pred_check_branch
          %128 = sbr.rel (%p126) target = $region16
        $region15: #{attention_forward.3} parent=11 // pred_region
          %s129 = smul.u32 2, %s18
          %p130 = scmp.lt.s32.totalorder %s129, 1
          %s131 = scalar_select %p130, %s129, 1
          %p132 = scmp.lt.s32.totalorder %s20, 0
          %s133 = scalar_select %p132, %s20, 0
          %s134 = sadd.s32 %s133, %s131
          %s135 = smul.addr %s134, 8
          %s136 = scalar_lea.vmem %s0, %s135
          %s137 = smul.u32 2, %s18
        $region16: #{attention_forward.3} parent=11 // pred_fallthru
          _
      $region12: #{attention_forward.3} parent=5 // pred_fallthru
        _
      %p138 = scmp.lt.s32.totalorder %s8, 3
      // Predicated region
      $region17: #{attention_forward.3} parent=5 // pred_check
        %p139 = pneg %p138
      $region18: #{attention_forward.3} parent=5 // pred_check_branch
        %141 = sbr.rel (%p139) target = $region20
      $region19: #{attention_forward.3} parent=5 // pred_region
        // Predicated region
        $region21: #{attention_forward.3} parent=19 // pred_check
          %p142 = pneg %p77
        $region22: #{attention_forward.3} parent=19 // pred_check_branch
          %144 = sbr.rel (%p142) target = $region24
        $region23: #{attention_forward.3} parent=19 // pred_region
          %s145 = sand.u32 %s67, 1
          %s146 = sand.u32 %s67, 1
          %s147 = smul.addr %s146, 32
          %s148 = scalar_lea.vmem [#allocation3], %s147
          %s149 = smul.u32 4, %s17
          %s150 = smul.addr %s149, 3
          %s151 = sadd.s32 %s16, %s150
          %s152 = smul.addr %s151, 8
          %s153 = scalar_lea.vmem %s1, %s152
          // Predicated region
          $region25: #{attention_forward.3} parent=23 // pred_check
            _
          $region26: #{attention_forward.3} parent=23 // pred_check_branch
            %155 = sbr.rel (0) target = $region28
          $region27: #{attention_forward.3} parent=23 // pred_region
            // Predicated region
            $region29: #{attention_forward.3} parent=27 // pred_check
              _
            $region30: #{attention_forward.3} parent=27 // pred_check_branch
              %157 = sbr.rel (0) target = $region32
            $region31: #{attention_forward.3} parent=27 // pred_region
              // Predicated region
              $region44: #{attention_forward.3} parent=31 // pred_check
                _
              $region45: #{attention_forward.3} parent=31 // pred_check_branch
                %179 = sbr.rel (0) target = $region47
              $region46: #{attention_forward.3} parent=31 // pred_region
                loop: start=0, step=1, limit=1
                $region48: #{attention_forward.3} parent=46 // loop_pre_header
                  _
                $region49: #{attention_forward.3} parent=46 // loop_header
                  %s181 = sphi 0, %s185
                  %p182 = scmp.ge.s32.totalorder %s181, 1
                  %s186 = sphi %s153, %s153
                  %s187 = sphi %s148, %s148
                $region50: #{attention_forward.3} parent=46 // loop_header_branch
                  %184 = sbr.rel (%p182) target = $region54
                $region51: #{attention_forward.3} parent=46 // loop_body
                  %v188 = vld [vmem:[%s186] sm:$0xff]
                  %189 = vst [vmem:[%s187] sm:$0xff] %v188
                  %v190 = vld [vmem:[%s186 + $0x18] sm:$0xff]
                  %191 = vst [vmem:[%s187 + $0x8] sm:$0xff] %v190
                  %v192 = vld [vmem:[%s186 + $0x30] sm:$0xff]
                  %193 = vst [vmem:[%s187 + $0x10] sm:$0xff] %v192
                  %v194 = vld [vmem:[%s186 + $0x48] sm:$0xff]
                  %195 = vst [vmem:[%s187 + $0x18] sm:$0xff] %v194
                $region52: #{attention_forward.3} parent=46 // loop_footer
                  %s185 = sadd.s32 1, %s181
                $region53: #{attention_forward.3} parent=46 // loop_footer_branch
                  %180 = sbr.rel target = $region49
                $region54: #{attention_forward.3} parent=46 // loop_exit
                  _
              $region47: #{attention_forward.3} parent=31 // pred_fallthru
                _
              // Predicated region
              $region55: #{attention_forward.3} parent=31 // pred_check
                _
              $region56: #{attention_forward.3} parent=31 // pred_check_branch
                %197 = sbr.rel target = $region58
              $region57: #{attention_forward.3} parent=31 // pred_region
                _
              $region58: #{attention_forward.3} parent=31 // pred_fallthru
                _
            $region32: #{attention_forward.3} parent=27 // pred_fallthru
              _
            // Predicated region
            $region33: #{attention_forward.3} parent=27 // pred_check
              _
            $region34: #{attention_forward.3} parent=27 // pred_check_branch
              %159 = sbr.rel target = $region36
            $region35: #{attention_forward.3} parent=27 // pred_region
              %s161 = ssub.s32 256, 1
              loop: start=0, step=1, limit=1
              $region37: #{attention_forward.3} parent=35 // loop_pre_header
                _
              $region38: #{attention_forward.3} parent=35 // loop_header
                %s163 = sphi 0, %s167
                %p164 = scmp.ge.s32.totalorder %s163, 1
                %s168 = sphi %s153, %s153
                %s169 = sphi %s148, %s148
              $region39: #{attention_forward.3} parent=35 // loop_header_branch
                %166 = sbr.rel (%p164) target = $region43
              $region40: #{attention_forward.3} parent=35 // loop_body
                %v170 = vld [vmem:[%s168] sm:%s161]
                %171 = vst [vmem:[%s169] sm:%s161] %v170
                %v172 = vld [vmem:[%s168 + $0x18] sm:%s161]
                %173 = vst [vmem:[%s169 + $0x8] sm:%s161] %v172
                %v174 = vld [vmem:[%s168 + $0x30] sm:%s161]
                %175 = vst [vmem:[%s169 + $0x10] sm:%s161] %v174
                %v176 = vld [vmem:[%s168 + $0x48] sm:%s161]
                %177 = vst [vmem:[%s169 + $0x18] sm:%s161] %v176
              $region41: #{attention_forward.3} parent=35 // loop_footer
                %s167 = sadd.s32 1, %s163
              $region42: #{attention_forward.3} parent=35 // loop_footer_branch
                %162 = sbr.rel target = $region38
              $region43: #{attention_forward.3} parent=35 // loop_exit
                _
            $region36: #{attention_forward.3} parent=27 // pred_fallthru
              _
          $region28: #{attention_forward.3} parent=23 // pred_fallthru
            _
          %198 = vnop
        $region24: #{attention_forward.3} parent=19 // pred_fallthru
          _
      $region20: #{attention_forward.3} parent=5 // pred_fallthru
        _
      %p199 = scmp.le.s32.totalorder 1, %s8
      %p200 = scmp.lt.s32.totalorder %s8, 4
      %p201 = pnand %p199, %p200
      %p202 = pneg %p201
      // Predicated region
      $region59: #{attention_forward.3} parent=5 // pred_check
        _
      $region60: #{attention_forward.3} parent=5 // pred_check_branch
        %204 = sbr.rel (%p201) target = $region62
      $region61: #{attention_forward.3} parent=5 // pred_region
        %s205 = ssub.s32 %s8, 1
        %s206 = sand.u32 %s70, 1
        %s207 = sand.u32 %s70, 1
        %s208 = smul.addr %s207, 32
        %s209 = scalar_lea.vmem [#allocation3], %s208
        // Predicated region
        $region63: #{attention_forward.3} parent=61 // pred_check
          %p210 = pneg %p83
        $region64: #{attention_forward.3} parent=61 // pred_check_branch
          %212 = sbr.rel (%p210) target = $region66
        $region65: #{attention_forward.3} parent=61 // pred_region
          _
        $region66: #{attention_forward.3} parent=61 // pred_fallthru
          _
        %s213 = smul.u32 2, %s18
        %p214 = scmp.lt.s32.totalorder %s213, 1
        %s215 = scalar_select %p214, %s213, 1
        %p216 = scmp.lt.s32.totalorder %s20, 0
        %s217 = scalar_select %p216, %s20, 0
        %s218 = sadd.s32 %s217, %s215
        %s219 = smul.addr %s218, 8
        %s220 = scalar_lea.vmem %s0, %s219
        %p221 = pneg %p55
        %p222 = pneg %p52
        %s223 = sand.u32 %s70, 1
        %s224 = sand.u32 %s70, 1
        %s225 = smul.addr %s224, 32
        %s226 = scalar_lea.vmem [#allocation3], %s225
        %p227 = pneg %p83
        %p228 = pneg %p80
        %p229 = pneg %p111
        %p230 = pneg %p108
        %s231 = sand.u32 %s98, 1
        %s232 = sand.u32 %s98, 1
        %s233 = smul.addr %s232, 8
        %s234 = scalar_lea.vmem [#allocation4], %s233
        %s235 = smul.u32 2, %s18
        %p236 = scmp.lt.s32.totalorder %s235, 1
        %s237 = scalar_select %p236, %s235, 1
        %p238 = scmp.lt.s32.totalorder %s20, 0
        %s239 = scalar_select %p238, %s20, 0
        %s240 = sadd.s32 %s239, %s237
        %s241 = smul.addr %s240, 8
        %s242 = scalar_lea.vmem %s0, %s241
        %s243 = smul.u32 2, %s18
        %s244 = smul.u32 4, %s20
        %s245 = smul.u32 2, %s18
        %p247 = scmp.eq.s32.totalorder %s20, 0
        // Predicated region
        $region67: #{attention_forward.3} parent=61 // pred_check
          %p248 = pneg %p247
        $region68: #{attention_forward.3} parent=61 // pred_check_branch
          %250 = sbr.rel (%p248) target = $region70
        $region69: #{attention_forward.3} parent=61 // pred_region
          %251 = vst [vmem:[#allocation2] sm:$0xff] 0.0
          %252 = vst [vmem:[#allocation2 + $0x8] sm:$0xff] 0.0
        $region70: #{attention_forward.3} parent=61 // pred_fallthru
          _
        %v253 = vld [vmem:[#allocation2] sm:$0xff]
        %v254 = vld [vmem:[#allocation2 + $0x8] sm:$0xff]
        %v255 = vld [vmem:[%s242] sm:$0xff]
        %v256 = vld [vmem:[%s242 + $0x8] sm:$0xff]
        %v257 = vpack.c.bf16 %v256, %v255
        %v258 = vld [vmem:[%s209] sm:$0xff]
        %v259 = vld [vmem:[%s209 + $0x8] sm:$0xff]
        %v260 = vld [vmem:[%s209 + $0x10] sm:$0xff]
        %v261 = vld [vmem:[%s209 + $0x18] sm:$0xff]
        %v262 = vpack.c.bf16 %v259, %v258
        %v263 = vpack.c.bf16 %v261, %v260
        %vm264 = vcmask 261120
        %v266 = vsel %vm264, %v257, 0
        %268 = vmatpush.bf16.msra.mxu0 0
        %269 = vmatpush.bf16.msra.mxu0 0
        %270 = vmatpush.bf16.msra.mxu0 0
        %271 = vmatpush.bf16.msra.mxu0 0
        %272 = vmatpush.bf16.msra.mxu0 0
        %273 = vmatpush.bf16.msra.mxu0 0
        %274 = vmatpush.bf16.msra.mxu0 %v263
        %275 = vmatpush.bf16.msra.mxu0 %v262
        %276 = vmatmul.bf16.gmra.mxu0 %v266
        %v277 = vpop.f32.mrf.mxu0
        %v278 = vadd.f32 0.0, %v277
        %v279 = vpop.f32.mrf.mxu0
        %v280 = vadd.f32 0.0, %v279
        %281 = vdwg.mxu0
        %v282 = vadd.f32 %v253, %v278
        %v283 = vadd.f32 %v254, %v280
        %284 = vst [vmem:[#allocation2] sm:$0xff] %v282
        %285 = vst [vmem:[#allocation2 + $0x8] sm:$0xff] %v283
        // Predicated region
        $region71: #{attention_forward.3} parent=61 // pred_check
          %p286 = pneg %p247
        $region72: #{attention_forward.3} parent=61 // pred_check_branch
          %288 = sbr.rel (%p286) target = $region74
        $region73: #{attention_forward.3} parent=61 // pred_region
          %v289 = vld [vmem:[#allocation2] sm:$0xff]
          %v290 = vld [vmem:[#allocation2 + $0x8] sm:$0xff]
          %v291 = vpack.c.bf16 %v289, %v289
          %v292 = vpack.c.bf16 %v290, %v290
          %293 = vst [vmem:[%s234] sm:$0xf] %v291
          %294 = vst [vmem:[%s234 + $0x4] sm:$0xf] %v292
        $region74: #{attention_forward.3} parent=61 // pred_fallthru
          _
        %s295 = sand.u32 %s98, 1
        %s296 = sand.u32 %s98, 1
        %s297 = smul.addr %s296, 8
        %s298 = scalar_lea.vmem [#allocation4], %s297
        // Predicated region
        $region75: #{attention_forward.3} parent=61 // pred_check
          %p299 = pneg %p108
        $region76: #{attention_forward.3} parent=61 // pred_check_branch
          %301 = sbr.rel (%p299) target = $region78
        $region77: #{attention_forward.3} parent=61 // pred_region
          %s302 = smul.u32 2, %s18
          %s303 = smul.addr %s302, 3
          %s304 = sadd.s32 %s19, %s303
          %s305 = smul.addr %s304, 4
          %s306 = scalar_lea.vmem %s2, %s305
          // Predicated region
          $region79: #{attention_forward.3} parent=77 // pred_check
            _
          $region80: #{attention_forward.3} parent=77 // pred_check_branch
            %308 = sbr.rel (0) target = $region82
          $region81: #{attention_forward.3} parent=77 // pred_region
            // Predicated region
            $region83: #{attention_forward.3} parent=81 // pred_check
              _
            $region84: #{attention_forward.3} parent=81 // pred_check_branch
              %310 = sbr.rel target = $region86
            $region85: #{attention_forward.3} parent=81 // pred_region
              // Predicated region
              $region98: #{attention_forward.3} parent=85 // pred_check
                _
              $region99: #{attention_forward.3} parent=85 // pred_check_branch
                %328 = sbr.rel (0) target = $region101
              $region100: #{attention_forward.3} parent=85 // pred_region
                loop: start=0, step=1, limit=1
                $region102: #{attention_forward.3} parent=100 // loop_pre_header
                  _
                $region103: #{attention_forward.3} parent=100 // loop_header
                  %s330 = sphi 0, %s334
                  %p331 = scmp.ge.s32.totalorder %s330, 1
                  %s335 = sphi %s298, %s298
                  %s336 = sphi %s306, %s306
                $region104: #{attention_forward.3} parent=100 // loop_header_branch
                  %333 = sbr.rel (%p331) target = $region108
                $region105: #{attention_forward.3} parent=100 // loop_body
                  _
                $region106: #{attention_forward.3} parent=100 // loop_footer
                  %s334 = sadd.s32 1, %s330
                $region107: #{attention_forward.3} parent=100 // loop_footer_branch
                  %329 = sbr.rel target = $region103
                $region108: #{attention_forward.3} parent=100 // loop_exit
                  _
                %s338 = ssub.s32 16, 1
                loop: start=0, step=1, limit=1
                $region109: #{attention_forward.3} parent=100 // loop_pre_header
                  _
                $region110: #{attention_forward.3} parent=100 // loop_header
                  %s340 = sphi 0, %s344
                  %p341 = scmp.ge.s32.totalorder %s340, 1
                  %s345 = sphi %s298, %s298
                  %s346 = sphi %s306, %s306
                $region111: #{attention_forward.3} parent=100 // loop_header_branch
                  %343 = sbr.rel (%p341) target = $region115
                $region112: #{attention_forward.3} parent=100 // loop_body
                  %v347 = vld [vmem:[%s345] sm:%s338]
                  %348 = vst [vmem:[%s346] sm:%s338] %v347
                  %v349 = vld [vmem:[%s345 + $0x4] sm:%s338]
                  %350 = vst [vmem:[%s346 + $0xc] sm:%s338] %v349
                $region113: #{attention_forward.3} parent=100 // loop_footer
                  %s344 = sadd.s32 1, %s340
                $region114: #{attention_forward.3} parent=100 // loop_footer_branch
                  %339 = sbr.rel target = $region110
                $region115: #{attention_forward.3} parent=100 // loop_exit
                  _
              $region101: #{attention_forward.3} parent=85 // pred_fallthru
                _
            $region86: #{attention_forward.3} parent=81 // pred_fallthru
              _
            // Predicated region
            $region87: #{attention_forward.3} parent=81 // pred_check
              _
            $region88: #{attention_forward.3} parent=81 // pred_check_branch
              %312 = sbr.rel (0) target = $region90
            $region89: #{attention_forward.3} parent=81 // pred_region
              %s314 = ssub.s32 16, 1
              loop: start=0, step=1, limit=1
              $region91: #{attention_forward.3} parent=89 // loop_pre_header
                _
              $region92: #{attention_forward.3} parent=89 // loop_header
                %s316 = sphi 0, %s320
                %p317 = scmp.ge.s32.totalorder %s316, 1
                %s321 = sphi %s298, %s298
                %s322 = sphi %s306, %s306
              $region93: #{attention_forward.3} parent=89 // loop_header_branch
                %319 = sbr.rel (%p317) target = $region97
              $region94: #{attention_forward.3} parent=89 // loop_body
                %v323 = vld [vmem:[%s321] sm:%s314]
                %324 = vst [vmem:[%s322] sm:%s314] %v323
                %v325 = vld [vmem:[%s321 + $0x4] sm:%s314]
                %326 = vst [vmem:[%s322 + $0xc] sm:%s314] %v325
              $region95: #{attention_forward.3} parent=89 // loop_footer
                %s320 = sadd.s32 1, %s316
              $region96: #{attention_forward.3} parent=89 // loop_footer_branch
                %315 = sbr.rel target = $region92
              $region97: #{attention_forward.3} parent=89 // loop_exit
                _
            $region90: #{attention_forward.3} parent=81 // pred_fallthru
              _
          $region82: #{attention_forward.3} parent=77 // pred_fallthru
            _
          %351 = vnop
        $region78: #{attention_forward.3} parent=61 // pred_fallthru
          _
      $region62: #{attention_forward.3} parent=5 // pred_fallthru
        _
      %p352 = scmp.le.s32.totalorder 2, %s8
      // Predicated region
      $region116: #{attention_forward.3} parent=5 // pred_check
        %p353 = pneg %p352
      $region117: #{attention_forward.3} parent=5 // pred_check_branch
        %355 = sbr.rel (%p353) target = $region119
      $region118: #{attention_forward.3} parent=5 // pred_region
        %s356 = ssub.s32 %s8, 2
        // Predicated region
        $region120: #{attention_forward.3} parent=118 // pred_check
          %p357 = pneg %p114
        $region121: #{attention_forward.3} parent=118 // pred_check_branch
          %359 = sbr.rel (%p357) target = $region123
        $region122: #{attention_forward.3} parent=118 // pred_region
          %s360 = sand.u32 %s99, 1
          %s361 = sand.u32 %s99, 1
          %s362 = smul.addr %s361, 8
          %s363 = scalar_lea.vmem [#allocation4], %s362
        $region123: #{attention_forward.3} parent=118 // pred_fallthru
          _
      $region119: #{attention_forward.3} parent=5 // pred_fallthru
        _
    $region6: #{attention_forward.3} parent=1 // loop_footer
      %s12 = sadd.s32 1, %s8
    $region7: #{attention_forward.3} parent=1 // loop_footer_branch
      %7 = sbr.rel target = $region3
    $region8: #{attention_forward.3} parent=1 // loop_exit
      _

// kernel: attention_forward.5
$region0: #{attention_forward.5}
  #allocation0 [shape = 'u32[]', space=smem, size = 0x4, offset = 0x4, fixed_abs, tag = 'smem constant byte address 0x4 - core index']
  #allocation1 [shape = 'u32[72,128]{1,0:T(1,128)}', space=vmem, size = 0x9000, scoped, tag = 'internal scratch']
  #allocation2 [shape = 'f32[16,32]{1,0:T(8,128)}', space=vmem, size = 0x2000, scoped, tag = 'scratch operand']
  %s0 = inlined_call_operand.vmem [shape: bf16[16,128], index: 0, kind: input, shape index: {}]
  %s1 = inlined_call_operand.vmem [shape: f32[128,32], index: 1, kind: input, shape index: {}]
  %s2 = inlined_call_operand.vmem [shape: f32[1,32], index: 2, kind: input, shape index: {}]
  %s3 = inlined_call_operand.hbm [shape: f32[16,32], index: 3, kind: output, shape index: {}]
  %s4 = sld [smem:[#allocation0]]
  $region30: #{attention_forward.5} parent=0
    _
  %s6 = ssub.s32 1, %s4
  %s7 = scalar_select 0, %s6, %s4
  $region1: #{attention_forward.5} parent=0
    #allocation3 [shape = 'u8[8192]{0}', space=vmem, size = 0x2000, scoped, tag = 'output window, operand 0, single buffered']
    #allocation4 [shape = 's32[1]{0}', space=sflag, size = 0x4, scoped, tag = 'scoped memory for attention_forward.5']
    %8 = vsyncpa [#allocation4], 0
    // Predicated region
    $region2: #{attention_forward.5} parent=1 // pred_check
      _
    $region3: #{attention_forward.5} parent=1 // pred_check_branch
      %10 = sbr.rel (0) target = $region5
    $region4: #{attention_forward.5} parent=1 // pred_region
      _
    $region5: #{attention_forward.5} parent=1 // pred_fallthru
      _
    // Predicated region
    $region6: #{attention_forward.5} parent=1 // pred_check
      _
    $region7: #{attention_forward.5} parent=1 // pred_check_branch
      %12 = sbr.rel (0) target = $region9
    $region8: #{attention_forward.5} parent=1 // pred_region
      _
    $region9: #{attention_forward.5} parent=1 // pred_fallthru
      _
    // Predicated region
    $region10: #{attention_forward.5} parent=1 // pred_check
      _
    $region11: #{attention_forward.5} parent=1 // pred_check_branch
      %14 = sbr.rel (0) target = $region13
    $region12: #{attention_forward.5} parent=1 // pred_region
      _
    $region13: #{attention_forward.5} parent=1 // pred_fallthru
      _
    %p15 = scmp.eq.s32.totalorder 0, 0
    // Predicated region
    $region14: #{attention_forward.5} parent=1 // pred_check
      %p16 = pneg %p15
    $region15: #{attention_forward.5} parent=1 // pred_check_branch
      %18 = sbr.rel (%p16) target = $region17
    $region16: #{attention_forward.5} parent=1 // pred_region
      %vm19 = vcmask 261120
      %20 = vst.msk [vmem:[#allocation2] sm:$0xff] %vm19, 0.0
      %21 = vst.msk [vmem:[#allocation2 + $0x8] sm:$0xff] %vm19, 0.0
    $region17: #{attention_forward.5} parent=1 // pred_fallthru
      _
    %v22 = vld [vmem:[#allocation2] sm:$0xff]
    %v23 = vld [vmem:[#allocation2 + $0x8] sm:$0xff]
    %v24 = vld [vmem:[%s0] sm:$0xf]
    %v25 = vld [vmem:[%s0 + $0x4] sm:$0xf]
    %v26 = vld [vmem:[%s1] sm:$0xff]
    %v27 = vld [vmem:[%s1 + $0x8] sm:$0xff]
    %v28 = vld [vmem:[%s1 + $0x10] sm:$0xff]
    %v29 = vld [vmem:[%s1 + $0x18] sm:$0xff]
    %v30 = vld [vmem:[%s1 + $0x20] sm:$0xff]
    %v31 = vld [vmem:[%s1 + $0x28] sm:$0xff]
    %v32 = vld [vmem:[%s1 + $0x30] sm:$0xff]
    %v33 = vld [vmem:[%s1 + $0x38] sm:$0xff]
    %v34 = vld [vmem:[%s1 + $0x40] sm:$0xff]
    %v35 = vld [vmem:[%s1 + $0x48] sm:$0xff]
    %v36 = vld [vmem:[%s1 + $0x50] sm:$0xff]
    %v37 = vld [vmem:[%s1 + $0x58] sm:$0xff]
    %v38 = vld [vmem:[%s1 + $0x60] sm:$0xff]
    %v39 = vld [vmem:[%s1 + $0x68] sm:$0xff]
    %v40 = vld [vmem:[%s1 + $0x70] sm:$0xff]
    %v41 = vld [vmem:[%s1 + $0x78] sm:$0xff]
    %v42 = vpack.c.bf16 %v27, %v26
    %v43 = vpack.c.bf16 %v29, %v28
    %v44 = vpack.c.bf16 %v31, %v30
    %v45 = vpack.c.bf16 %v33, %v32
    %v46 = vpack.c.bf16 %v35, %v34
    %v47 = vpack.c.bf16 %v37, %v36
    %v48 = vpack.c.bf16 %v39, %v38
    %v49 = vpack.c.bf16 %v41, %v40
    %v52 = vunpack.c.l.b16 %v24
    %v53 = vunpack.c.l.b16 %v25
    %v54 = vpack.c.b16 %v53, %v52
    %56 = vmatpush.bf16.msra.mxu0 %v49
    %57 = vmatpush.bf16.msra.mxu0 %v48
    %58 = vmatpush.bf16.msra.mxu0 %v47
    %59 = vmatpush.bf16.msra.mxu0 %v46
    %60 = vmatpush.bf16.msra.mxu0 %v45
    %61 = vmatpush.bf16.msra.mxu0 %v44
    %62 = vmatpush.bf16.msra.mxu0 %v43
    %63 = vmatpush.bf16.msra.mxu0 %v42
    %64 = vmatmul.bf16.gmra.mxu0 %v54
    %v65 = vpop.f32.mrf.mxu0
    %v66 = vadd.f32 0.0, %v65
    %v67 = vpop.f32.mrf.mxu0
    %v68 = vadd.f32 0.0, %v67
    %69 = vdwg.mxu0
    %v70 = vadd.f32 %v22, %v66
    %v71 = vadd.f32 %v23, %v68
    %vm72 = vcmask 261120
    %73 = vst.msk [vmem:[#allocation2] sm:$0xff] %vm72, %v70
    %74 = vst.msk [vmem:[#allocation2 + $0x8] sm:$0xff] %vm72, %v71
    // Predicated region
    $region18: #{attention_forward.5} parent=1 // pred_check
      %p75 = pneg %p15
    $region19: #{attention_forward.5} parent=1 // pred_check_branch
      %77 = sbr.rel (%p75) target = $region21
    $region20: #{attention_forward.5} parent=1 // pred_region
      %v78 = vld [vmem:[#allocation2] sm:$0xff]
      %v79 = vld [vmem:[#allocation2 + $0x8] sm:$0xff]
      %v80 = vld [vmem:[%s2] sm:$0x1]
      %v82 = vperm.slane %v80, 0
      %v84 = vadd.f32 %v78, %v82
      %v85 = vadd.f32 %v79, %v82
      %86 = vst.msk [vmem:[#allocation3] sm:$0xff] %vm72, %v84
      %87 = vst.msk [vmem:[#allocation3 + $0x8] sm:$0xff] %vm72, %v85
    $region21: #{attention_forward.5} parent=1 // pred_fallthru
      _
    // Predicated region
    $region22: #{attention_forward.5} parent=1 // pred_check
      _
    $region23: #{attention_forward.5} parent=1 // pred_check_branch
      %89 = sbr.rel (0) target = $region25
    $region24: #{attention_forward.5} parent=1 // pred_region
      %91 = vsyncadd [#allocation4], 0
      %s92 = sshll.u32 [#allocation3], 4
      %s93 = int_to_ptr.vmem [resolvable:$true] %s92
      %s94 = sshll.u32 %s3, 4
      %s95 = int_to_ptr.hbm [resolvable:$true] %s94
      %100 = dma.vmem_to_hbm [thread:$0]  %s93, 256, %s95, [#allocation4], 128, 128, 8
    $region25: #{attention_forward.5} parent=1 // pred_fallthru
      _
    // Predicated region
    $region26: #{attention_forward.5} parent=1 // pred_check
      _
    $region27: #{attention_forward.5} parent=1 // pred_check_branch
      %102 = sbr.rel (0) target = $region29
    $region28: #{attention_forward.5} parent=1 // pred_region
      %104 = dma.done [#allocation4], 256
    $region29: #{attention_forward.5} parent=1 // pred_fallthru
      _
    %105 = vsyncpa [#allocation4], 1

// kernel: attention_forward.4
$region0: #{attention_forward.4}
  #allocation0 [shape = 'u32[]', space=smem, size = 0x4, offset = 0x4, fixed_abs, tag = 'smem constant byte address 0x4 - core index']
  #allocation1 [shape = 'u32[72,128]{1,0:T(1,128)}', space=vmem, size = 0x9000, scoped, tag = 'internal scratch']
  #allocation2 [shape = 'f32[4,8,1]{2,1,0:T(8,128)}', space=vmem, size = 0x4000, scoped, tag = 'scratch operand']
  #allocation3 [shape = 'f32[4,8,1]{2,1,0:T(8,128)}', space=vmem, size = 0x4000, scoped, tag = 'scratch operand']
  #allocation4 [shape = 'f32[4,8,32]{2,1,0:T(8,128)}', space=vmem, size = 0x4000, scoped, tag = 'scratch operand']
  %s0 = inlined_call_operand.vmem [shape: bf16[2,8,384], index: 0, kind: input, shape index: {}, may-alias: {0,1,2}]
  %s1 = inlined_call_operand.vmem [shape: bf16[2,8,384], index: 1, kind: input, shape index: {}, may-alias: {0,1,2}]
  %s2 = inlined_call_operand.vmem [shape: bf16[2,8,384], index: 2, kind: input, shape index: {}, may-alias: {0,1,2}]
  %s3 = inlined_call_operand.vmem [shape: bf16[2,8,128], index: 3, kind: output, shape index: {}]
  %s4 = sld [smem:[#allocation0]]
  $region53: #{attention_forward.4} parent=0
    _
  %s6 = ssub.s32 1, %s4
  %s7 = scalar_select 0, %s6, %s4
  loop: start=0, step=1, limit=4
  $region2: #{attention_forward.4} parent=0 // loop_pre_header
    _
  $region3: #{attention_forward.4} parent=0 // loop_header
    %s9 = sphi 0, %s13
    %p10 = scmp.ge.s32.totalorder %s9, 4
    %s16 = sphi 0, %s35
    %s17 = sphi 0, %s31
    %s18 = sphi 0, %s27
    %s19 = sphi 0, %s16
    %s20 = sphi 0, %s17
    %s21 = sphi 0, %s18
    %s22 = sphi 0, %s19
    %s23 = sphi 0, %s20
    %s24 = sphi 0, %s21
    %s40 = sphi 0, %s42
    %s43 = sphi 0, %s40
    %s44 = sphi 0, %s43
    %s60 = sphi 0, %s44
    %s68 = sphi 0, %s70
    %s71 = sphi 0, %s68
    %s72 = sphi 0, %s71
    %s88 = sphi 0, %s72
    %s96 = sphi 0, %s98
    %s99 = sphi 0, %s96
    %s100 = sphi 0, %s99
    %s116 = sphi 0, %s100
    %s124 = sphi 0, %s126
    %s127 = sphi 0, %s124
    %s128 = sphi 0, %s127
    %s144 = sphi 0, %s128
  $region4: #{attention_forward.4} parent=0 // loop_header_branch
    %12 = sbr.rel (%p10) target = $region8
  $region5: #{attention_forward.4} parent=0 // loop_body
    %s14 = ssub.s32 %s9, 1
    %s15 = ssub.s32 %s9, 2
    %s25 = sadd.s32 1, %s18
    %p26 = scmp.ge.s32.totalorder %s25, 1
    %s27 = scalar_select %p26, 0, %s25
    %s28 = sadd.s32 1, %s17
    %s29 = scalar_select %p26, %s28, %s17
    %p30 = scmp.ge.s32.totalorder %s29, 1
    %s31 = scalar_select %p30, 0, %s29
    %s32 = sadd.s32 1, %s16
    %s33 = scalar_select %p30, %s32, %s16
    %p34 = scmp.ge.s32.totalorder %s33, 2
    %s35 = scalar_select %p34, 0, %s33
    %s36 = ssub.s32 %s16, %s35
    %s37 = ssub.s32 %s17, %s31
    %s38 = sor.u32 %s36, %s37
    %p39 = scmp.eq.s32.totalorder %s38, 0
    %s41 = sadd.s32 %s40, 1
    %s42 = scalar_select %p39, %s40, %s41
    %p45 = pneg %p39
    %p46 = scmp.eq.s32.totalorder %s9, 1
    %p47 = por %p45, %p46
    %p48 = scmp.ne.s32.totalorder %s40, %s43
    %p49 = scmp.eq.s32.totalorder %s9, 0
    %p50 = por %p48, %p49
    %p51 = scmp.ne.s32.totalorder %s40, %s43
    %p52 = scmp.eq.s32.totalorder %s14, 1
    %p53 = por %p51, %p52
    %p54 = scmp.ne.s32.totalorder %s43, %s44
    %p55 = scmp.eq.s32.totalorder %s14, 0
    %p56 = por %p54, %p55
    %p57 = scmp.ne.s32.totalorder %s43, %s44
    %p58 = scmp.eq.s32.totalorder %s15, 1
    %p59 = por %p57, %p58
    %p61 = scmp.ne.s32.totalorder %s44, %s60
    %p62 = scmp.eq.s32.totalorder %s15, 0
    %p63 = por %p61, %p62
    %s64 = ssub.s32 %s16, %s35
    %s65 = ssub.s32 %s18, %s27
    %s66 = sor.u32 %s64, %s65
    %p67 = scmp.eq.s32.totalorder %s66, 0
    %s69 = sadd.s32 %s68, 1
    %s70 = scalar_select %p67, %s68, %s69
    %p73 = pneg %p67
    %p74 = scmp.eq.s32.totalorder %s9, 1
    %p75 = por %p73, %p74
    %p76 = scmp.ne.s32.totalorder %s68, %s71
    %p77 = scmp.eq.s32.totalorder %s9, 0
    %p78 = por %p76, %p77
    %p79 = scmp.ne.s32.totalorder %s68, %s71
    %p80 = scmp.eq.s32.totalorder %s14, 1
    %p81 = por %p79, %p80
    %p82 = scmp.ne.s32.totalorder %s71, %s72
    %p83 = scmp.eq.s32.totalorder %s14, 0
    %p84 = por %p82, %p83
    %p85 = scmp.ne.s32.totalorder %s71, %s72
    %p86 = scmp.eq.s32.totalorder %s15, 1
    %p87 = por %p85, %p86
    %p89 = scmp.ne.s32.totalorder %s72, %s88
    %p90 = scmp.eq.s32.totalorder %s15, 0
    %p91 = por %p89, %p90
    %s92 = ssub.s32 %s16, %s35
    %s93 = ssub.s32 %s18, %s27
    %s94 = sor.u32 %s92, %s93
    %p95 = scmp.eq.s32.totalorder %s94, 0
    %s97 = sadd.s32 %s96, 1
    %s98 = scalar_select %p95, %s96, %s97
    %p101 = pneg %p95
    %p102 = scmp.eq.s32.totalorder %s9, 1
    %p103 = por %p101, %p102
    %p104 = scmp.ne.s32.totalorder %s96, %s99
    %p105 = scmp.eq.s32.totalorder %s9, 0
    %p106 = por %p104, %p105
    %p107 = scmp.ne.s32.totalorder %s96, %s99
    %p108 = scmp.eq.s32.totalorder %s14, 1
    %p109 = por %p107, %p108
    %p110 = scmp.ne.s32.totalorder %s99, %s100
    %p111 = scmp.eq.s32.totalorder %s14, 0
    %p112 = por %p110, %p111
    %p113 = scmp.ne.s32.totalorder %s99, %s100
    %p114 = scmp.eq.s32.totalorder %s15, 1
    %p115 = por %p113, %p114
    %p117 = scmp.ne.s32.totalorder %s100, %s116
    %p118 = scmp.eq.s32.totalorder %s15, 0
    %p119 = por %p117, %p118
    %s120 = ssub.s32 %s16, %s35
    %s121 = ssub.s32 %s17, %s31
    %s122 = sor.u32 %s120, %s121
    %p123 = scmp.eq.s32.totalorder %s122, 0
    %s125 = sadd.s32 %s124, 1
    %s126 = scalar_select %p123, %s124, %s125
    %p129 = pneg %p123
    %p130 = scmp.eq.s32.totalorder %s9, 1
    %p131 = por %p129, %p130
    %p132 = scmp.ne.s32.totalorder %s124, %s127
    %p133 = scmp.eq.s32.totalorder %s9, 0
    %p134 = por %p132, %p133
    %p135 = scmp.ne.s32.totalorder %s124, %s127
    %p136 = scmp.eq.s32.totalorder %s14, 1
    %p137 = por %p135, %p136
    %p138 = scmp.ne.s32.totalorder %s127, %s128
    %p139 = scmp.eq.s32.totalorder %s14, 0
    %p140 = por %p138, %p139
    %p141 = scmp.ne.s32.totalorder %s127, %s128
    %p142 = scmp.eq.s32.totalorder %s15, 1
    %p143 = por %p141, %p142
    %p145 = scmp.ne.s32.totalorder %s128, %s144
    %p146 = scmp.eq.s32.totalorder %s15, 0
    %p147 = por %p145, %p146
    %p148 = scmp.le.s32.totalorder 1, %s9
    %p149 = scmp.lt.s32.totalorder %s9, 3
    %p150 = pnand %p148, %p149
    %p151 = pneg %p150
    // Predicated region
    $region9: #{attention_forward.4} parent=5 // pred_check
      _
    $region10: #{attention_forward.4} parent=5 // pred_check_branch
      %153 = sbr.rel (%p150) target = $region12
    $region11: #{attention_forward.4} parent=5 // pred_region
      %s154 = ssub.s32 %s9, 1
    $region12: #{attention_forward.4} parent=5 // pred_fallthru
      _
    %p155 = scmp.lt.s32.totalorder %s9, 2
    // Predicated region
    $region13: #{attention_forward.4} parent=5 // pred_check
      %p156 = pneg %p155
    $region14: #{attention_forward.4} parent=5 // pred_check_branch
      %158 = sbr.rel (%p156) target = $region16
    $region15: #{attention_forward.4} parent=5 // pred_region
      // Predicated region
      $region17: #{attention_forward.4} parent=15 // pred_check
        %p159 = pneg %p50
      $region18: #{attention_forward.4} parent=15 // pred_check_branch
        %161 = sbr.rel (%p159) target = $region20
      $region19: #{attention_forward.4} parent=15 // pred_region
        %p162 = scmp.lt.s32.totalorder %s16, 1
        %s163 = scalar_select %p162, %s16, 1
        %p164 = scmp.lt.s32.totalorder %s17, 0
        %s165 = scalar_select %p164, %s17, 0
        %s166 = smul.addr %s165, 3
        %s167 = smul.addr %s163, 3
        %s168 = sadd.s32 %s166, %s167
        %s169 = smul.addr %s168, 4
        %s170 = scalar_lea.vmem %s0, %s169
      $region20: #{attention_forward.4} parent=15 // pred_fallthru
        _
      // Predicated region
      $region21: #{attention_forward.4} parent=15 // pred_check
        %p171 = pneg %p78
      $region22: #{attention_forward.4} parent=15 // pred_check_branch
        %173 = sbr.rel (%p171) target = $region24
      $region23: #{attention_forward.4} parent=15 // pred_region
        %p174 = scmp.lt.s32.totalorder %s16, 1
        %s175 = scalar_select %p174, %s16, 1
        %p176 = scmp.lt.s32.totalorder %s18, 0
        %s177 = scalar_select %p176, %s18, 0
        %s178 = smul.addr %s177, 3
        %s179 = sadd.s32 1, %s178
        %s180 = smul.addr %s175, 3
        %s181 = sadd.s32 %s179, %s180
        %s182 = smul.addr %s181, 4
        %s183 = scalar_lea.vmem %s1, %s182
      $region24: #{attention_forward.4} parent=15 // pred_fallthru
        _
      // Predicated region
      $region25: #{attention_forward.4} parent=15 // pred_check
        %p184 = pneg %p106
      $region26: #{attention_forward.4} parent=15 // pred_check_branch
        %186 = sbr.rel (%p184) target = $region28
      $region27: #{attention_forward.4} parent=15 // pred_region
        %p187 = scmp.lt.s32.totalorder %s16, 1
        %s188 = scalar_select %p187, %s16, 1
        %p189 = scmp.lt.s32.totalorder %s18, 0
        %s190 = scalar_select %p189, %s18, 0
        %s191 = smul.addr %s190, 3
        %s192 = sadd.s32 2, %s191
        %s193 = smul.addr %s188, 3
        %s194 = sadd.s32 %s192, %s193
        %s195 = smul.addr %s194, 4
        %s196 = scalar_lea.vmem %s2, %s195
      $region28: #{attention_forward.4} parent=15 // pred_fallthru
        _
    $region16: #{attention_forward.4} parent=5 // pred_fallthru
      _
    %p197 = scmp.le.s32.totalorder 1, %s9
    %p198 = scmp.lt.s32.totalorder %s9, 3
    %p199 = pnand %p197, %p198
    %p200 = pneg %p199
    // Predicated region
    $region29: #{attention_forward.4} parent=5 // pred_check
      _
    $region30: #{attention_forward.4} parent=5 // pred_check_branch
      %202 = sbr.rel (%p199) target = $region32
    $region31: #{attention_forward.4} parent=5 // pred_region
      %s203 = ssub.s32 %s9, 1
      %p204 = scmp.lt.s32.totalorder %s19, 1
      %s205 = scalar_select %p204, %s19, 1
      %p206 = scmp.lt.s32.totalorder %s20, 0
      %s207 = scalar_select %p206, %s20, 0
      %s208 = smul.addr %s207, 3
      %s209 = smul.addr %s205, 3
      %s210 = sadd.s32 %s208, %s209
      %s211 = smul.addr %s210, 4
      %s212 = scalar_lea.vmem %s0, %s211
      %p213 = pneg %p56
      %p214 = pneg %p53
      %p215 = scmp.lt.s32.totalorder %s19, 1
      %s216 = scalar_select %p215, %s19, 1
      %p217 = scmp.lt.s32.totalorder %s21, 0
      %s218 = scalar_select %p217, %s21, 0
      %s219 = smul.addr %s218, 3
      %s220 = sadd.s32 1, %s219
      %s221 = smul.addr %s216, 3
      %s222 = sadd.s32 %s220, %s221
      %s223 = smul.addr %s222, 4
      %s224 = scalar_lea.vmem %s1, %s223
      %p225 = pneg %p84
      %p226 = pneg %p81
      %p227 = scmp.lt.s32.totalorder %s19, 1
      %s228 = scalar_select %p227, %s19, 1
      %p229 = scmp.lt.s32.totalorder %s21, 0
      %s230 = scalar_select %p229, %s21, 0
      %s231 = smul.addr %s230, 3
      %s232 = sadd.s32 2, %s231
      %s233 = smul.addr %s228, 3
      %s234 = sadd.s32 %s232, %s233
      %s235 = smul.addr %s234, 4
      %s236 = scalar_lea.vmem %s2, %s235
      %p237 = pneg %p112
      %p238 = pneg %p109
      %p239 = pneg %p140
      %p240 = pneg %p137
      %p241 = scmp.lt.s32.totalorder %s19, 1
      %s242 = scalar_select %p241, %s19, 1
      %p243 = scmp.lt.s32.totalorder %s20, 0
      %s244 = scalar_select %p243, %s20, 0
      %s245 = sadd.s32 %s244, %s242
      %s246 = smul.addr %s245, 4
      %s247 = scalar_lea.vmem %s3, %s246
      %p248 = scmp.lt.s32.totalorder %s19, 1
      %s249 = scalar_select %p248, %s19, 1
      %p250 = scmp.lt.s32.totalorder %s20, 0
      %s251 = scalar_select %p250, %s20, 0
      %s252 = smul.addr %s251, 3
      %s253 = smul.addr %s249, 3
      %s254 = sadd.s32 %s252, %s253
      %s255 = smul.addr %s254, 4
      %s256 = scalar_lea.vmem %s0, %s255
      %p257 = scmp.lt.s32.totalorder %s19, 1
      %s258 = scalar_select %p257, %s19, 1
      %p259 = scmp.lt.s32.totalorder %s21, 0
      %s260 = scalar_select %p259, %s21, 0
      %s261 = smul.addr %s260, 3
      %s262 = sadd.s32 1, %s261
      %s263 = smul.addr %s258, 3
      %s264 = sadd.s32 %s262, %s263
      %s265 = smul.addr %s264, 4
      %s266 = scalar_lea.vmem %s1, %s265
      %p267 = scmp.lt.s32.totalorder %s19, 1
      %s268 = scalar_select %p267, %s19, 1
      %p269 = scmp.lt.s32.totalorder %s21, 0
      %s270 = scalar_select %p269, %s21, 0
      %s271 = smul.addr %s270, 3
      %s272 = sadd.s32 2, %s271
      %s273 = smul.addr %s268, 3
      %s274 = sadd.s32 %s272, %s273
      %s275 = smul.addr %s274, 4
      %s276 = scalar_lea.vmem %s2, %s275
      %p277 = scmp.lt.s32.totalorder %s19, 1
      %s278 = scalar_select %p277, %s19, 1
      %p279 = scmp.lt.s32.totalorder %s20, 0
      %s280 = scalar_select %p279, %s20, 0
      %s281 = sadd.s32 %s280, %s278
      %s282 = smul.addr %s281, 4
      %s283 = scalar_lea.vmem %s3, %s282
      %p285 = scmp.eq.s32.totalorder %s21, 0
      // Predicated region
      $region33: #{attention_forward.4} parent=31 // pred_check
        %p286 = pneg %p285
      $region34: #{attention_forward.4} parent=31 // pred_check_branch
        %288 = sbr.rel (%p286) target = $region36
      $region35: #{attention_forward.4} parent=31 // pred_region
        %vm289 = vcmask 7168
        %290 = vst.msk [vmem:[#allocation2] sm:$0xff] %vm289, -inf
        %291 = vst.msk [vmem:[#allocation2 + $0x8] sm:$0xff] %vm289, -inf
        %292 = vst.msk [vmem:[#allocation2 + $0x10] sm:$0xff] %vm289, -inf
        %293 = vst.msk [vmem:[#allocation2 + $0x18] sm:$0xff] %vm289, -inf
        %294 = vst.msk [vmem:[#allocation3] sm:$0xff] %vm289, 0.0
        %295 = vst.msk [vmem:[#allocation3 + $0x8] sm:$0xff] %vm289, 0.0
        %296 = vst.msk [vmem:[#allocation3 + $0x10] sm:$0xff] %vm289, 0.0
        %297 = vst.msk [vmem:[#allocation3 + $0x18] sm:$0xff] %vm289, 0.0
        %vm298 = vcmask 261120
        %299 = vst.msk [vmem:[#allocation4] sm:$0xff] %vm298, 0.0
        %300 = vst.msk [vmem:[#allocation4 + $0x8] sm:$0xff] %vm298, 0.0
        %301 = vst.msk [vmem:[#allocation4 + $0x10] sm:$0xff] %vm298, 0.0
        %302 = vst.msk [vmem:[#allocation4 + $0x18] sm:$0xff] %vm298, 0.0
      $region36: #{attention_forward.4} parent=31 // pred_fallthru
        _
      %v303 = vld [vmem:[%s256] sm:$0xf]
      %v304 = vld [vmem:[%s266] sm:$0xf]
      %v305 = vld [vmem:[%s276] sm:$0xf]
      %vm306 = vcmask 261120
      %v308 = vsel %vm306, %v303, 0
      %v311 = vsel %vm306, %v304, 0
      %313 = vmatpush.bf16.xpose.msra.mxu0 0
      %314 = vmatpush.bf16.xpose.msra.mxu0 0
      %315 = vmatpush.bf16.xpose.msra.mxu0 0
      %316 = vmatpush.bf16.xpose.msra.mxu0 0
      %317 = vmatpush.bf16.xpose.msra.mxu0 0
      %318 = vmatpush.bf16.xpose.msra.mxu0 0
      %319 = vmatpush.bf16.xpose.msra.mxu0 0
      %320 = vmatpush.bf16.xpose.msra.mxu0 %v311
      %321 = vmatmul.bf16.gmra.mxu0 %v308
      %v322 = vpop.f32.mrf.mxu0
      %v323 = vadd.f32 0.0, %v322
      %v324 = vpop.f32.mrf.mxu0
      %325 = vdwg.mxu0
      %v326 = vld [vmem:[#allocation2] sm:$0xff]
      %vm327 = vcmask 64512
      %v328 = vsel %vm327, %v323, -inf
      %329 = vmax.xlane.f32.xlu0 %v328
      %v330 = vpop.xlane.xlu0 %329
      %v331 = vmax.f32 %v326, %v330
      %v332 = vsub.f32 %v326, %v331
      %v333 = vmul.f32 %v332, 1.442695
      %v334 = vpow.pop %v333
      %336 = vset.pattern.permute.xlu0 0
      %337 = vperm.xlu0 %336, %v331
      %v338 = vpop.permute.xlu0 %337
      %v340 = vsub.f32 %v323, %v338
      %v341 = vmul.f32 %v340, 1.442695
      %v342 = vpow.pop %v341
      %v343 = vld [vmem:[#allocation3] sm:$0xff]
      %v344 = vmul.f32 %v334, %v343
      %v345 = vsel %vm327, %v342, 0.0
      %346 = vadd.xlane.f32.xlu0 %v345
      %v347 = vpop.xlane.xlu0 %346
      %v348 = vadd.f32 %v344, %v347
      %vm349 = vcmask 7168
      %350 = vst.msk [vmem:[#allocation3] sm:$0xff] %vm349, %v348
      %v351 = vld [vmem:[#allocation4] sm:$0xff]
      %353 = vset.pattern.permute.xlu0 0
      %354 = vperm.xlu0 %353, %v334
      %v355 = vpop.permute.xlu0 %354
      %v357 = vmul.f32 %v355, %v351
      %v358 = vpack.c.bf16 %v342, %v342
      %v360 = vsel %vm327, %v358, 0
      %vm362 = vcmask 1043456
      %v364 = vsel %vm362, %v305, 0
      %366 = vmatpush.bf16.msra.mxu0 0
      %367 = vmatpush.bf16.msra.mxu0 0
      %368 = vmatpush.bf16.msra.mxu0 0
      %369 = vmatpush.bf16.msra.mxu0 0
      %370 = vmatpush.bf16.msra.mxu0 0
      %371 = vmatpush.bf16.msra.mxu0 0
      %372 = vmatpush.bf16.msra.mxu0 0
      %373 = vmatpush.bf16.msra.mxu0 %v364
      %374 = vmatmul.bf16.gmra.mxu0 %v360
      %v375 = vpop.f32.mrf.mxu0
      %v376 = vadd.f32 0.0, %v375
      %v377 = vpop.f32.mrf.mxu0
      %378 = vdwg.mxu0
      %v379 = vadd.f32 %v357, %v376
      %380 = vst.msk [vmem:[#allocation4] sm:$0xff] %vm306, %v379
      %381 = vst.msk [vmem:[#allocation2] sm:$0xff] %vm349, %v331
      %v382 = vld [vmem:[%s256] sm:$0xf]
      %v383 = vld [vmem:[%s266] sm:$0xf]
      %v384 = vld [vmem:[%s276] sm:$0xf]
      %v386 = vunpack.c.l.b16 %v382
      %v387 = vpack.c.b16 %v386, %v386
      %388 = vrot.lane.b32.xlu0 %v387, 96
      %v389 = vpop.permute.xlu0 %388
      %v391 = vunpack.c.l.b16 %v383
      %v392 = vpack.c.b16 %v391, %v391
      %393 = vrot.lane.b32.xlu0 %v392, 96
      %v394 = vpop.permute.xlu0 %393
      %v396 = vsel %vm306, %v389, 0
      %v399 = vsel %vm306, %v394, 0
      %401 = vmatpush.bf16.xpose.msra.mxu0 0
      %402 = vmatpush.bf16.xpose.msra.mxu0 0
      %403 = vmatpush.bf16.xpose.msra.mxu0 0
      %404 = vmatpush.bf16.xpose.msra.mxu0 0
      %405 = vmatpush.bf16.xpose.msra.mxu0 0
      %406 = vmatpush.bf16.xpose.msra.mxu0 0
      %407 = vmatpush.bf16.xpose.msra.mxu0 0
      %408 = vmatpush.bf16.xpose.msra.mxu0 %v399
      %409 = vmatmul.bf16.gmra.mxu0 %v396
      %v410 = vpop.f32.mrf.mxu0
      %v411 = vadd.f32 0.0, %v410
      %v412 = vpop.f32.mrf.mxu0
      %413 = vdwg.mxu0
      %s414 = scalar_lea.vmem [#allocation2], 8
      %v415 = vld [vmem:[%s414] sm:$0xff]
      %v416 = vsel %vm327, %v411, -inf
      %417 = vmax.xlane.f32.xlu0 %v416
      %v418 = vpop.xlane.xlu0 %417
      %v419 = vmax.f32 %v415, %v418
      %v420 = vsub.f32 %v415, %v419
      %v421 = vmul.f32 %v420, 1.442695
      %v422 = vpow.pop %v421
      %424 = vset.pattern.permute.xlu0 0
      %425 = vperm.xlu0 %424, %v419
      %v426 = vpop.permute.xlu0 %425
      %v428 = vsub.f32 %v411, %v426
      %v429 = vmul.f32 %v428, 1.442695
      %v430 = vpow.pop %v429
      %s431 = scalar_lea.vmem [#allocation3], 8
      %v432 = vld [vmem:[%s431] sm:$0xff]
      %v433 = vmul.f32 %v422, %v432
      %v434 = vsel %vm327, %v430, 0.0
      %435 = vadd.xlane.f32.xlu0 %v434
      %v436 = vpop.xlane.xlu0 %435
      %v437 = vadd.f32 %v433, %v436
      %438 = vst.msk [vmem:[%s431] sm:$0xff] %vm349, %v437
      %s439 = scalar_lea.vmem [#allocation4], 8
      %v440 = vld [vmem:[%s439] sm:$0xff]
      %442 = vset.pattern.permute.xlu0 0
      %443 = vperm.xlu0 %442, %v422
      %v444 = vpop.permute.xlu0 %443
      %v446 = vmul.f32 %v444, %v440
      %v447 = vpack.c.bf16 %v430, %v430
      %v449 = vunpack.c.l.b16 %v384
      %v450 = vpack.c.b16 %v449, %v449
      %451 = vrot.lane.b32.xlu0 %v450, 96
      %v452 = vpop.permute.xlu0 %451
      %v454 = vsel %vm327, %v447, 0
      %v457 = vsel %vm362, %v452, 0
      %459 = vmatpush.bf16.msra.mxu0 0
      %460 = vmatpush.bf16.msra.mxu0 0
      %461 = vmatpush.bf16.msra.mxu0 0
      %462 = vmatpush.bf16.msra.mxu0 0
      %463 = vmatpush.bf16.msra.mxu0 0
      %464 = vmatpush.bf16.msra.mxu0 0
      %465 = vmatpush.bf16.msra.mxu0 0
      %466 = vmatpush.bf16.msra.mxu0 %v457
      %467 = vmatmul.bf16.gmra.mxu0 %v454
      %v468 = vpop.f32.mrf.mxu0
      %v469 = vadd.f32 0.0, %v468
      %v470 = vpop.f32.mrf.mxu0
      %471 = vdwg.mxu0
      %v472 = vadd.f32 %v446, %v469
      %473 = vst.msk [vmem:[%s439] sm:$0xff] %vm306, %v472
      %474 = vst.msk [vmem:[%s414] sm:$0xff] %vm349, %v419
      %v475 = vld [vmem:[%s256] sm:$0xf]
      %v476 = vld [vmem:[%s266] sm:$0xf]
      %v477 = vld [vmem:[%s276] sm:$0xf]
      %v479 = vunpack.c.l.b16 %v475
      %v480 = vpack.c.b16 %v479, %v479
      %481 = vrot.lane.b32.xlu0 %v480, 64
      %v482 = vpop.permute.xlu0 %481
      %v484 = vunpack.c.l.b16 %v476
      %v485 = vpack.c.b16 %v484, %v484
      %486 = vrot.lane.b32.xlu0 %v485, 64
      %v487 = vpop.permute.xlu0 %486
      %v489 = vsel %vm306, %v482, 0
      %v492 = vsel %vm306, %v487, 0
      %494 = vmatpush.bf16.xpose.msra.mxu0 0
      %495 = vmatpush.bf16.xpose.msra.mxu0 0
      %496 = vmatpush.bf16.xpose.msra.mxu0 0
      %497 = vmatpush.bf16.xpose.msra.mxu0 0
      %498 = vmatpush.bf16.xpose.msra.mxu0 0
      %499 = vmatpush.bf16.xpose.msra.mxu0 0
      %500 = vmatpush.bf16.xpose.msra.mxu0 0
      %501 = vmatpush.bf16.xpose.msra.mxu0 %v492
      %502 = vmatmul.bf16.gmra.mxu0 %v489
      %v503 = vpop.f32.mrf.mxu0
      %v504 = vadd.f32 0.0, %v503
      %v505 = vpop.f32.mrf.mxu0
      %506 = vdwg.mxu0
      %s507 = scalar_lea.vmem [#allocation2], 16
      %v508 = vld [vmem:[%s507] sm:$0xff]
      %v509 = vsel %vm327, %v504, -inf
      %510 = vmax.xlane.f32.xlu0 %v509
      %v511 = vpop.xlane.xlu0 %510
      %v512 = vmax.f32 %v508, %v511
      %v513 = vsub.f32 %v508, %v512
      %v514 = vmul.f32 %v513, 1.442695
      %v515 = vpow.pop %v514
      %517 = vset.pattern.permute.xlu0 0
      %518 = vperm.xlu0 %517, %v512
      %v519 = vpop.permute.xlu0 %518
      %v521 = vsub.f32 %v504, %v519
      %v522 = vmul.f32 %v521, 1.442695
      %v523 = vpow.pop %v522
      %s524 = scalar_lea.vmem [#allocation3], 16
      %v525 = vld [vmem:[%s524] sm:$0xff]
      %v526 = vmul.f32 %v515, %v525
      %v527 = vsel %vm327, %v523, 0.0
      %528 = vadd.xlane.f32.xlu0 %v527
      %v529 = vpop.xlane.xlu0 %528
      %v530 = vadd.f32 %v526, %v529
      %531 = vst.msk [vmem:[%s524] sm:$0xff] %vm349, %v530
      %s532 = scalar_lea.vmem [#allocation4], 16
      %v533 = vld [vmem:[%s532] sm:$0xff]
      %535 = vset.pattern.permute.xlu0 0
      %536 = vperm.xlu0 %535, %v515
      %v537 = vpop.permute.xlu0 %536
      %v539 = vmul.f32 %v537, %v533
      %v540 = vpack.c.bf16 %v523, %v523
      %v542 = vunpack.c.l.b16 %v477
      %v543 = vpack.c.b16 %v542, %v542
      %544 = vrot.lane.b32.xlu0 %v543, 64
      %v545 = vpop.permute.xlu0 %544
      %v547 = vsel %vm327, %v540, 0
      %v550 = vsel %vm362, %v545, 0
      %552 = vmatpush.bf16.msra.mxu0 0
      %553 = vmatpush.bf16.msra.mxu0 0
      %554 = vmatpush.bf16.msra.mxu0 0
      %555 = vmatpush.bf16.msra.mxu0 0
      %556 = vmatpush.bf16.msra.mxu0 0
      %557 = vmatpush.bf16.msra.mxu0 0
      %558 = vmatpush.bf16.msra.mxu0 0
      %559 = vmatpush.bf16.msra.mxu0 %v550
      %560 = vmatmul.bf16.gmra.mxu0 %v547
      %v561 = vpop.f32.mrf.mxu0
      %v562 = vadd.f32 0.0, %v561
      %v563 = vpop.f32.mrf.mxu0
      %564 = vdwg.mxu0
      %v565 = vadd.f32 %v539, %v562
      %566 = vst.msk [vmem:[%s532] sm:$0xff] %vm306, %v565
      %567 = vst.msk [vmem:[%s507] sm:$0xff] %vm349, %v512
      %v568 = vld [vmem:[%s256] sm:$0xf]
      %v569 = vld [vmem:[%s266] sm:$0xf]
      %v570 = vld [vmem:[%s276] sm:$0xf]
      %v572 = vunpack.c.l.b16 %v568
      %v573 = vpack.c.b16 %v572, %v572
      %574 = vrot.lane.b32.xlu0 %v573, 32
      %v575 = vpop.permute.xlu0 %574
      %v577 = vunpack.c.l.b16 %v569
      %v578 = vpack.c.b16 %v577, %v577
      %579 = vrot.lane.b32.xlu0 %v578, 32
      %v580 = vpop.permute.xlu0 %579
      %v582 = vsel %vm306, %v575, 0
      %v585 = vsel %vm306, %v580, 0
      %587 = vmatpush.bf16.xpose.msra.mxu0 0
      %588 = vmatpush.bf16.xpose.msra.mxu0 0
      %589 = vmatpush.bf16.xpose.msra.mxu0 0
      %590 = vmatpush.bf16.xpose.msra.mxu0 0
      %591 = vmatpush.bf16.xpose.msra.mxu0 0
      %592 = vmatpush.bf16.xpose.msra.mxu0 0
      %593 = vmatpush.bf16.xpose.msra.mxu0 0
      %594 = vmatpush.bf16.xpose.msra.mxu0 %v585
      %595 = vmatmul.bf16.gmra.mxu0 %v582
      %v596 = vpop.f32.mrf.mxu0
      %v597 = vadd.f32 0.0, %v596
      %v598 = vpop.f32.mrf.mxu0
      %599 = vdwg.mxu0
      %s600 = scalar_lea.vmem [#allocation2], 24
      %v601 = vld [vmem:[%s600] sm:$0xff]
      %v602 = vsel %vm327, %v597, -inf
      %603 = vmax.xlane.f32.xlu0 %v602
      %v604 = vpop.xlane.xlu0 %603
      %v605 = vmax.f32 %v601, %v604
      %v606 = vsub.f32 %v601, %v605
      %v607 = vmul.f32 %v606, 1.442695
      %v608 = vpow.pop %v607
      %610 = vset.pattern.permute.xlu0 0
      %611 = vperm.xlu0 %610, %v605
      %v612 = vpop.permute.xlu0 %611
      %v614 = vsub.f32 %v597, %v612
      %v615 = vmul.f32 %v614, 1.442695
      %v616 = vpow.pop %v615
      %s617 = scalar_lea.vmem [#allocation3], 24
      %v618 = vld [vmem:[%s617] sm:$0xff]
      %v619 = vmul.f32 %v608, %v618
      %v620 = vsel %vm327, %v616, 0.0
      %621 = vadd.xlane.f32.xlu0 %v620
      %v622 = vpop.xlane.xlu0 %621
      %v623 = vadd.f32 %v619, %v622
      %624 = vst.msk [vmem:[%s617] sm:$0xff] %vm349, %v623
      %s625 = scalar_lea.vmem [#allocation4], 24
      %v626 = vld [vmem:[%s625] sm:$0xff]
      %628 = vset.pattern.permute.xlu0 0
      %629 = vperm.xlu0 %628, %v608
      %v630 = vpop.permute.xlu0 %629
      %v632 = vmul.f32 %v630, %v626
      %v633 = vpack.c.bf16 %v616, %v616
      %v635 = vunpack.c.l.b16 %v570
      %v636 = vpack.c.b16 %v635, %v635
      %637 = vrot.lane.b32.xlu0 %v636, 32
      %v638 = vpop.permute.xlu0 %637
      %v640 = vsel %vm327, %v633, 0
      %v643 = vsel %vm362, %v638, 0
      %645 = vmatpush.bf16.msra.mxu0 0
      %646 = vmatpush.bf16.msra.mxu0 0
      %647 = vmatpush.bf16.msra.mxu0 0
      %648 = vmatpush.bf16.msra.mxu0 0
      %649 = vmatpush.bf16.msra.mxu0 0
      %650 = vmatpush.bf16.msra.mxu0 0
      %651 = vmatpush.bf16.msra.mxu0 0
      %652 = vmatpush.bf16.msra.mxu0 %v643
      %653 = vmatmul.bf16.gmra.mxu0 %v640
      %v654 = vpop.f32.mrf.mxu0
      %v655 = vadd.f32 0.0, %v654
      %v656 = vpop.f32.mrf.mxu0
      %657 = vdwg.mxu0
      %v658 = vadd.f32 %v632, %v655
      %659 = vst.msk [vmem:[%s625] sm:$0xff] %vm306, %v658
      %660 = vst.msk [vmem:[%s600] sm:$0xff] %vm349, %v605
      // Predicated region
      $region37: #{attention_forward.4} parent=31 // pred_check
        %p661 = pneg %p285
      $region38: #{attention_forward.4} parent=31 // pred_check_branch
        %663 = sbr.rel (%p661) target = $region40
      $region39: #{attention_forward.4} parent=31 // pred_region
        %v664 = vld [vmem:[#allocation3] sm:$0xff]
        %v665 = vrcp.pop %v664
        %v666 = vmul.f32 %v664, %v665
        %v667 = vsub.f32 1.0, %v666
        %v668 = vmul.f32 %v665, %v667
        %v669 = vadd.f32 %v665, %v668
        %vm670 = vweird.f32 %v664
        %vm671 = vweird.f32 %v665
        %vm672 = vmor %vm670, %vm671
        %v673 = vsel %vm672, %v665, %v669
        %v674 = vand.u32 2147483647, %v664
        %vm675 = vcmp.eq.f32.partialorder %v674, 8.507059e+37
        %v676 = vand.u32 %v664, 2147483648
        %v677 = vor.u32 1.1754944e-38, %v676
        %v678 = vsel %vm675, %v677, %v673
        %v679 = vld [vmem:[#allocation4] sm:$0xff]
        %681 = vset.pattern.permute.xlu0 0
        %682 = vperm.xlu0 %681, %v678
        %v683 = vpop.permute.xlu0 %682
        %v685 = vmul.f32 %v679, %v683
        %v686 = vld [vmem:[%s431] sm:$0xff]
        %v687 = vrcp.pop %v686
        %v688 = vmul.f32 %v686, %v687
        %v689 = vsub.f32 1.0, %v688
        %v690 = vmul.f32 %v687, %v689
        %v691 = vadd.f32 %v687, %v690
        %vm692 = vweird.f32 %v686
        %vm693 = vweird.f32 %v687
        %vm694 = vmor %vm692, %vm693
        %v695 = vsel %vm694, %v687, %v691
        %v696 = vand.u32 2147483647, %v686
        %vm697 = vcmp.eq.f32.partialorder %v696, 8.507059e+37
        %v698 = vand.u32 %v686, 2147483648
        %v699 = vor.u32 1.1754944e-38, %v698
        %v700 = vsel %vm697, %v699, %v695
        %v701 = vld [vmem:[%s439] sm:$0xff]
        %703 = vset.pattern.permute.xlu0 0
        %704 = vperm.xlu0 %703, %v700
        %v705 = vpop.permute.xlu0 %704
        %v707 = vmul.f32 %v701, %v705
        %v708 = vld [vmem:[%s524] sm:$0xff]
        %v709 = vrcp.pop %v708
        %v710 = vmul.f32 %v708, %v709
        %v711 = vsub.f32 1.0, %v710
        %v712 = vmul.f32 %v709, %v711
        %v713 = vadd.f32 %v709, %v712
        %vm714 = vweird.f32 %v708
        %vm715 = vweird.f32 %v709
        %vm716 = vmor %vm714, %vm715
        %v717 = vsel %vm716, %v709, %v713
        %v718 = vand.u32 2147483647, %v708
        %vm719 = vcmp.eq.f32.partialorder %v718, 8.507059e+37
        %v720 = vand.u32 %v708, 2147483648
        %v721 = vor.u32 1.1754944e-38, %v720
        %v722 = vsel %vm719, %v721, %v717
        %v723 = vld [vmem:[%s532] sm:$0xff]
        %725 = vset.pattern.permute.xlu0 0
        %726 = vperm.xlu0 %725, %v722
        %v727 = vpop.permute.xlu0 %726
        %v729 = vmul.f32 %v723, %v727
        %v730 = vld [vmem:[%s617] sm:$0xff]
        %v731 = vrcp.pop %v730
        %v732 = vmul.f32 %v730, %v731
        %v733 = vsub.f32 1.0, %v732
        %v734 = vmul.f32 %v731, %v733
        %v735 = vadd.f32 %v731, %v734
        %vm736 = vweird.f32 %v730
        %vm737 = vweird.f32 %v731
        %vm738 = vmor %vm736, %vm737
        %v739 = vsel %vm738, %v731, %v735
        %v740 = vand.u32 2147483647, %v730
        %vm741 = vcmp.eq.f32.partialorder %v740, 8.507059e+37
        %v742 = vand.u32 %v730, 2147483648
        %v743 = vor.u32 1.1754944e-38, %v742
        %v744 = vsel %vm741, %v743, %v739
        %v745 = vld [vmem:[%s625] sm:$0xff]
        %747 = vset.pattern.permute.xlu0 0
        %748 = vperm.xlu0 %747, %v744
        %v749 = vpop.permute.xlu0 %748
        %v751 = vmul.f32 %v745, %v749
        %753 = vrot.lane.b32.xlu0 %v707, 32
        %v754 = vpop.permute.xlu0 %753
        %757 = vrot.lane.b32.xlu0 %v729, 64
        %v758 = vpop.permute.xlu0 %757
        %761 = vrot.lane.b32.xlu0 %v751, 96
        %v762 = vpop.permute.xlu0 %761
        %v764 = vsel %vm306, %v685, %v754
        %vm765 = vcmask 523264
        %v766 = vsel %vm765, %v764, %v758
        %vm767 = vcmask 785408
        %v768 = vsel %vm767, %v766, %v762
        %v769 = vpack.c.bf16 %v768, %v768
        %770 = vst [vmem:[%s283] sm:$0xf] %v769
      $region40: #{attention_forward.4} parent=31 // pred_fallthru
        _
      %p771 = scmp.lt.s32.totalorder %s19, 1
      %s772 = scalar_select %p771, %s19, 1
      %p773 = scmp.lt.s32.totalorder %s20, 0
      %s774 = scalar_select %p773, %s20, 0
      %s775 = sadd.s32 %s774, %s772
      %s776 = smul.addr %s775, 4
      %s777 = scalar_lea.vmem %s3, %s776
      // Predicated region
      $region41: #{attention_forward.4} parent=31 // pred_check
        %p778 = pneg %p137
      $region42: #{attention_forward.4} parent=31 // pred_check_branch
        %780 = sbr.rel (%p778) target = $region44
      $region43: #{attention_forward.4} parent=31 // pred_region
        _
      $region44: #{attention_forward.4} parent=31 // pred_fallthru
        _
    $region32: #{attention_forward.4} parent=5 // pred_fallthru
      _
    %p781 = scmp.le.s32.totalorder 2, %s9
    // Predicated region
    $region45: #{attention_forward.4} parent=5 // pred_check
      %p782 = pneg %p781
    $region46: #{attention_forward.4} parent=5 // pred_check_branch
      %784 = sbr.rel (%p782) target = $region48
    $region47: #{attention_forward.4} parent=5 // pred_region
      %s785 = ssub.s32 %s9, 2
      // Predicated region
      $region49: #{attention_forward.4} parent=47 // pred_check
        %p786 = pneg %p143
      $region50: #{attention_forward.4} parent=47 // pred_check_branch
        %788 = sbr.rel (%p786) target = $region52
      $region51: #{attention_forward.4} parent=47 // pred_region
        %p789 = scmp.lt.s32.totalorder %s22, 1
        %s790 = scalar_select %p789, %s22, 1
        %p791 = scmp.lt.s32.totalorder %s23, 0
        %s792 = scalar_select %p791, %s23, 0
        %s793 = sadd.s32 %s792, %s790
        %s794 = smul.addr %s793, 4
        %s795 = scalar_lea.vmem %s3, %s794
      $region52: #{attention_forward.4} parent=47 // pred_fallthru
        _
    $region48: #{attention_forward.4} parent=5 // pred_fallthru
      _
  $region6: #{attention_forward.4} parent=0 // loop_footer
    %s13 = sadd.s32 1, %s9
  $region7: #{attention_forward.4} parent=0 // loop_footer_branch
    %8 = sbr.rel target = $region3
  $region8: #{attention_forward.4} parent=0 // loop_exit
    _

</llo_original>
